<compile_context>
chip_gen: v7x
topology: tpu7x:2x2x1
jax: 0.10.0
libtpu: 0.0.40
codegen_flags: <defaults>
</compile_context>

<pallas_src>
import numpy as np
import jax
import jax.numpy as jnp
from jax import lax
from jax.experimental import pallas as pl
from jax.experimental.pallas import tpu as pltpu


def _reflect(k: int, n: int) -> int:
    # torch F.pad(mode='reflect') index for pad=1
    if k < 0:
        return -k
    if k >= n:
        return 2 * n - 2 - k
    return k


def _build_matrices(H: int, W: int):
    """Deterministic 'parameters': separable blur + pool operator matrices."""
    f = np.array([1.0, 2.0, 1.0], dtype=np.float64) / 4.0  # normalized 1D blur

    def blur_mat(n):
        M = np.zeros((n, n), dtype=np.float64)
        for i in range(n):
            for d in (-1, 0, 1):
                M[i, _reflect(i + d, n)] += f[d + 1]
        return M

    def pool_mat(n):
        P = np.zeros((n // 2, n), dtype=np.float64)
        for i in range(n // 2):
            P[i, 2 * i] = 0.5
            P[i, 2 * i + 1] = 0.5
        return P

    # Entries are exact dyadic rationals (k/16) -> exact in f32 (and bf16).
    A = (pool_mat(H) @ blur_mat(H)).astype(np.float32)        # (H//2, H)
    C = (pool_mat(W) @ blur_mat(W)).T.astype(np.float32)      # (W, W//2)
    return jnp.asarray(A), jnp.asarray(C)


def _blur_downsample_kernel(a_ref, x_ref, c_ref, o_ref):
    bnc, H, W = x_ref.shape
    H2 = a_ref.shape[0]
    W2 = c_ref.shape[1]

    x = x_ref[...]                                            # (Bnc, H, W)

    # Column pass (blur+pool along W): ONE MXU matmul with M = Bnc*H.
    z = jnp.dot(x.reshape(bnc * H, W), c_ref[...],
                preferred_element_type=jnp.float32,
                precision=lax.Precision.HIGHEST)              # (Bnc*H, W2)

    # Row pass (blur+pool along H): fold the planes onto the lane axis so it
    # is ONE MXU matmul with N = Bnc*W2 and the HBM store is lane-dense.
    zt = jnp.transpose(z.reshape(bnc, H, W2), (1, 0, 2))      # (H, Bnc, W2)
    zt = zt.reshape(H, bnc * W2)                              # (H, Bnc*W2)

    out = jnp.dot(a_ref[...], zt,
                  preferred_element_type=jnp.float32,
                  precision=lax.Precision.HIGHEST)            # (H2, Bnc*W2)

    o_ref[0] = out.astype(o_ref.dtype)


def _vmem_budget_bytes():
    """(planning budget, vmem_limit_bytes) from the chip's physical VMEM."""
    phys = 128 * 1024 * 1024                        # v5e / v6e per-TC VMEM
    try:
        info = pltpu.get_tpu_info()
        phys = int(getattr(info, "vmem_capacity_bytes", phys)) or phys
    except Exception:
        pass                                        # fall back to 128 MiB
    # Hard pipeline limit: headroom below physical (v7x: 48 MiB of 64 MiB).
    vmem_limit = min(100 * 1024 * 1024, (phys * 3) // 4)
    # Planning budget used to size Bnc, below the hard limit.
    budget = (vmem_limit * 3) // 4
    return budget, vmem_limit


def _plane_vmem_costs(H, W, x_itemsize, out_itemsize):
    """(fixed bytes for resident A/C, per-plane bytes incl. intermediates)."""
    H2, W2 = H // 2, W // 2
    # Resident operators (double-buffered by the pipeline despite constant
    # index_maps).  TODO(synk): pl.Buffered(1) on A/C would halve this.
    fixed = (H2 * H + W * W2) * 4 * 2
    # Pipeline buffers: input + output blocks, double-buffered.
    pipeline = (H * W * x_itemsize + H2 * W2 * out_itemsize) * 2
    # In-kernel intermediates: z, its transposed/folded copy, the f32 result
    # before the output cast, and a possible relayout copy of x (H % 8 != 0).
    interm = (2 * H * W2 + H2 * W2 + H * W) * 4
    return fixed, pipeline + interm


def _pick_block_nc(nc, H, W, x_itemsize, out_itemsize, budget_bytes,
                   min_steps=4):
    """Largest plane-batch that divides N*C, fits the VMEM budget, and (when
    possible) leaves >= min_steps grid steps (>= 2 per v7x TensorCore)."""
    fixed, per_plane = _plane_vmem_costs(H, W, x_itemsize, out_itemsize)
    if fixed + per_plane > budget_bytes:
        # TODO(synk): H/W tiling grid axis + separable stencil path for planes
        # that do not fit VMEM on their own.
        raise NotImplementedError(
            f"a single ({H}, {W}) plane plus operators/intermediates exceeds "
            f"the per-core VMEM budget ({budget_bytes} bytes)")
    max_bnc = max(1, (budget_bytes - fixed) // per_plane)
    divisors = [d for d in range(1, nc + 1) if nc % d == 0 and d <= max_bnc]
    if not divisors:
        return 1
    for steps in (min_steps, 2):
        ok = [d for d in divisors if nc // d >= steps]
        if ok:
            return max(ok)
    return max(divisors)


def blur_downsample(x: jax.Array) -> jax.Array:
    """x: (N, C, H, W), H and W even. Returns (N, C, H//2, W//2)."""
    N, Cc, H, W = x.shape
    assert H % 2 == 0 and W % 2 == 0 and H >= 2 and W >= 2, (
        "BlurDownsample Pallas kernel requires even H, W >= 2 "
        f"(got H={H}, W={W})")
    H2, W2 = H // 2, W // 2

    A, Cm = _build_matrices(H, W)
    nc = N * Cc
    budget, vmem_limit = _vmem_budget_bytes()
    itemsize = int(np.dtype(x.dtype).itemsize)
    bnc = _pick_block_nc(nc, H, W, itemsize, itemsize, budget)
    steps = nc // bnc
    xf = x.reshape(nc, H, W)

    out = pl.pallas_call(
        _blur_downsample_kernel,
        out_shape=jax.ShapeDtypeStruct((steps, H2, bnc * W2), x.dtype),
        grid=(steps,),
        in_specs=[
            pl.BlockSpec((H2, H), lambda i: (0, 0)),          # A (resident)
            pl.BlockSpec((bnc, H, W), lambda i: (i, 0, 0)),   # Bnc planes
            pl.BlockSpec((W, W2), lambda i: (0, 0)),          # C (resident)
        ],
        # Lane-dense output block: last two dims equal the full array dims.
        out_specs=pl.BlockSpec((1, H2, bnc * W2), lambda i: (i, 0, 0)),
        compiler_params=pltpu.CompilerParams(
            dimension_semantics=("parallel",),
            vmem_limit_bytes=vmem_limit,
        ),
    )(A, xf, Cm)

    # Un-interleave the lane-folded output:
    # (steps, H2, Bnc*W2) -> (steps, H2, Bnc, W2) -> (steps, Bnc, H2, W2)
    out = out.reshape(steps, H2, bnc, W2).transpose(0, 2, 1, 3)
    return out.reshape(N, Cc, H2, W2)


def _reference(x: jax.Array) -> jax.Array:
    """Pure-JAX reference: reflect-padded 3x3 normalized blur + 2x2 avg pool."""
    f = jnp.array([1.0, 2.0, 1.0], dtype=jnp.float32)
    k = (f[:, None] * f[None, :]) / 16.0
    N, C, H, W = x.shape
    xp = jnp.pad(x, ((0, 0), (0, 0), (1, 1), (1, 1)), mode="reflect")
    blur = jnp.zeros_like(x)
    for di in range(3):
        for dj in range(3):
            blur = blur + k[di, dj] * xp[:, :, di:di + H, dj:dj + W]
    return blur.reshape(N, C, H // 2, 2, W // 2, 2).mean(axis=(3, 5))


if __name__ == "__main__":
    key = jax.random.PRNGKey(0)
    x = jax.random.normal(key, (2, 4, 16, 16), dtype=jnp.float32)

    out = blur_downsample(x)
    out = jax.block_until_ready(out)

    ref = jax.block_until_ready(_reference(x))
    assert out.shape == (2, 4, 8, 8), out.shape
    np.testing.assert_allclose(np.asarray(out), np.asarray(ref),
                               rtol=1e-5, atol=1e-5)

    print("KERNEL_OK")
</pallas_src>

<mosaic_0001>
module attributes {stable_mosaic.version = 11 : i64} {
  func.func @_blur_downsample_kernel(%arg0: i32, %arg1: memref<8x16xf32, #tpu.memory_space<vmem>>, %arg2: memref<2x16x16xf32, #tpu.memory_space<vmem>>, %arg3: memref<16x8xf32, #tpu.memory_space<vmem>>, %arg4: memref<1x8x16xf32, #tpu.memory_space<vmem>>) attributes {dimension_semantics = [#tpu.dimension_semantics<parallel>], iteration_bounds = array<i64: 4>, scalar_prefetch = 0 : i64, scratch_operands = 0 : i64, tpu.core_type = #tpu.core_type<tc>, window_params = [{pipeline_mode = #tpu.pipeline_mode<synchronous>, transform_indices = @transform_0, window_bounds = array<i64: 8, 16>}, {transform_indices = @transform_1, window_bounds = array<i64: 2, 16, 16>}, {pipeline_mode = #tpu.pipeline_mode<synchronous>, transform_indices = @transform_2, window_bounds = array<i64: 16, 8>}, {transform_indices = @transform_3, window_bounds = array<i64: 1, 8, 16>}]} {
    %c0 = arith.constant 0 : index
    %c0_0 = arith.constant 0 : index
    %c0_1 = arith.constant 0 : index
    %0 = vector.load %arg2[%c0, %c0_0, %c0_1] : memref<2x16x16xf32, #tpu.memory_space<vmem>>, vector<2x16x16xf32>
    %1 = vector.shape_cast %0 : vector<2x16x16xf32> to vector<32x16xf32>
    %c0_2 = arith.constant 0 : index
    %c0_3 = arith.constant 0 : index
    %2 = vector.load %arg3[%c0_2, %c0_3] : memref<16x8xf32, #tpu.memory_space<vmem>>, vector<16x8xf32>
    %cst = arith.constant dense<0.000000e+00> : vector<32x8xf32>
    %3 = tpu.matmul %1, %2, %cst {dimension_numbers = #tpu.dot_dimension_numbers<[1], [0], [0], [1], [0, 0, 1, 1], [], []>, precision = #tpu.contract_precision<fp32>} : vector<32x16xf32>, vector<16x8xf32>, vector<32x8xf32> -> vector<32x8xf32>
    %4 = vector.shape_cast %3 : vector<32x8xf32> to vector<2x16x8xf32>
    %5 = tpu.transpose %4, [1, 0, 2] : vector<2x16x8xf32> -> vector<16x2x8xf32>
    %6 = vector.shape_cast %5 : vector<16x2x8xf32> to vector<16x16xf32>
    %c0_4 = arith.constant 0 : index
    %c0_5 = arith.constant 0 : index
    %7 = vector.load %arg1[%c0_4, %c0_5] : memref<8x16xf32, #tpu.memory_space<vmem>>, vector<8x16xf32>
    %cst_6 = arith.constant dense<0.000000e+00> : vector<8x16xf32>
    %8 = tpu.matmul %7, %6, %cst_6 {dimension_numbers = #tpu.dot_dimension_numbers<[1], [0], [0], [1], [0, 0, 1, 1], [], []>, precision = #tpu.contract_precision<fp32>} : vector<8x16xf32>, vector<16x16xf32>, vector<8x16xf32> -> vector<8x16xf32>
    %c0_7 = arith.constant 0 : index
    %c0_8 = arith.constant 0 : index
    %c0_9 = arith.constant 0 : index
    %9 = vector.load %arg4[%c0_7, %c0_8, %c0_9] : memref<1x8x16xf32, #tpu.memory_space<vmem>>, vector<1x8x16xf32>
    %10 = vector.shape_cast %9 : vector<1x8x16xf32> to vector<8x16xf32>
    %11 = vector.shape_cast %8 : vector<8x16xf32> to vector<1x8x16xf32>
    tpu.vector_store %arg4[%c0_7, %c0_8, %c0_9], %11 {strides = array<i32>} : memref<1x8x16xf32, #tpu.memory_space<vmem>>, vector<1x8x16xf32>,
    return
  }
  func.func @transform_0(%arg0: i32) -> (i32, i32) {
    %c0_i32 = arith.constant 0 : i32
    %c0_i32_0 = arith.constant 0 : i32
    %c0_i32_1 = arith.constant 0 : i32
    return %c0_i32, %c0_i32_0 : i32, i32
  }
  func.func @transform_1(%arg0: i32) -> (i32, i32, i32) {
    %c0_i32 = arith.constant 0 : i32
    %c0_i32_0 = arith.constant 0 : i32
    %c0_i32_1 = arith.constant 0 : i32
    return %arg0, %c0_i32, %c0_i32_0 : i32, i32, i32
  }
  func.func @transform_2(%arg0: i32) -> (i32, i32) {
    %c0_i32 = arith.constant 0 : i32
    %c0_i32_0 = arith.constant 0 : i32
    %c0_i32_1 = arith.constant 0 : i32
    return %c0_i32, %c0_i32_0 : i32, i32
  }
  func.func @transform_3(%arg0: i32) -> (i32, i32, i32) {
    %c0_i32 = arith.constant 0 : i32
    %c0_i32_0 = arith.constant 0 : i32
    %c0_i32_1 = arith.constant 0 : i32
    return %arg0, %c0_i32, %c0_i32_0 : i32, i32, i32
  }
}

</mosaic_0001>

<llo_original>
// kernel: tpu_custom_call.1
$region0: #{tpu_custom_call.1}
  #allocation0 [shape = 'u32[]', space=smem, size = 0x4, offset = 0x4, fixed_abs, tag = 'smem constant byte address 0x4 - core index']
  #allocation1 [shape = 'u32[144,128]{1,0:T(1,128)}', space=vmem, size = 0x12000, scoped, tag = 'internal scratch']
  %s0 = inlined_call_operand.hbm [shape: f32[8,16], index: 0, kind: input, shape index: {}]
  %s1 = inlined_call_operand.hbm [shape: f32[8,16,16], index: 1, kind: input, shape index: {}]
  %s2 = inlined_call_operand.hbm [shape: f32[16,8], index: 2, kind: input, shape index: {}]
  %s3 = inlined_call_operand.hbm [shape: f32[4,8,16], index: 3, kind: output, shape index: {}]
  %s4 = sld [smem:[#allocation0]]
  $region57: #{tpu_custom_call.1} parent=0
    _
  %s6 = ssub.s32 1, %s4
  %s7 = scalar_select 0, %s6, %s4
  $region1: #{tpu_custom_call.1} parent=0
    #allocation2 [shape = 'u8[4096]{0}', space=vmem, size = 0x1000, scoped, tag = 'input window, operand 0, single buffered']
    #allocation3 [shape = 's32[2]{0}', space=sflag, size = 0x8, scoped, tag = 'scoped memory for tpu_custom_call.1']
    #allocation4 [shape = 's32[2]{0}', space=sflag, size = 0x8, scoped, tag = 'scoped memory for tpu_custom_call.1']
    #allocation5 [shape = 'u8[32768]{0}', space=vmem, size = 0x8000, scoped, tag = 'input window, operand 1']
    #allocation6 [shape = 's32[2]{0}', space=sflag, size = 0x8, scoped, tag = 'scoped memory for tpu_custom_call.1']
    #allocation7 [shape = 'u8[8192]{0}', space=vmem, size = 0x2000, scoped, tag = 'input window, operand 2, single buffered']
    #allocation8 [shape = 'u8[8192]{0}', space=vmem, size = 0x2000, scoped, tag = 'output window, operand 0']
    %8 = vsyncpa [#allocation3], 0
    %9 = vsyncpa [#allocation6], 0
    %s10 = scalar_lea.sflag [#allocation6], 1
    %11 = vsyncpa %s10, 0
    %12 = vsyncpa [#allocation4], 0
    %s13 = scalar_lea.sflag [#allocation4], 1
    %14 = vsyncpa %s13, 0
    loop: start=0, step=1, limit=6
    $region2: #{tpu_custom_call.1} parent=1 // loop_pre_header
      _
    $region3: #{tpu_custom_call.1} parent=1 // loop_header
      %s16 = sphi 0, %s20
      %p17 = scmp.ge.s32.totalorder %s16, 6
      %s24 = sphi 0, %s24
      %s26 = sphi 0, %s24
      %s27 = sphi 0, %s26
      %s41 = sphi 0, %s27
      %s47 = sphi 0, %s49
      %s50 = sphi 0, %s47
      %s51 = sphi 0, %s50
      %s67 = sphi 0, %s51
      %s71 = sphi 0, %s71
      %s73 = sphi 0, %s71
      %s74 = sphi 0, %s73
      %s88 = sphi 0, %s74
      %s94 = sphi 0, %s96
      %s97 = sphi 0, %s94
      %s98 = sphi 0, %s97
      %s114 = sphi 0, %s98
    $region4: #{tpu_custom_call.1} parent=1 // loop_header_branch
      %19 = sbr.rel (%p17) target = $region8
    $region5: #{tpu_custom_call.1} parent=1 // loop_body
      %s21 = ssub.s32 %s16, 1
      %s22 = ssub.s32 %s16, 2
      %s23 = sadd.s32 %s16, 1
      %s25 = sadd.s32 %s24, 1
      %p28 = scmp.eq.s32.totalorder %s16, 3
      %p29 = scmp.ne.s32.totalorder %s24, %s26
      %p30 = scmp.eq.s32.totalorder %s16, 0
      %p31 = por %p29, %p30
      %p32 = scmp.ne.s32.totalorder %s24, %s26
      %p33 = scmp.eq.s32.totalorder %s21, 3
      %p34 = por %p32, %p33
      %p35 = scmp.ne.s32.totalorder %s26, %s27
      %p36 = scmp.eq.s32.totalorder %s21, 0
      %p37 = por %p35, %p36
      %p38 = scmp.ne.s32.totalorder %s26, %s27
      %p39 = scmp.eq.s32.totalorder %s22, 3
      %p40 = por %p38, %p39
      %p42 = scmp.ne.s32.totalorder %s27, %s41
      %p43 = scmp.eq.s32.totalorder %s22, 0
      %p44 = por %p42, %p43
      %s45 = ssub.s32 %s16, %s23
      %p46 = scmp.eq.s32.totalorder %s45, 0
      %s48 = sadd.s32 %s47, 1
      %s49 = scalar_select %p46, %s47, %s48
      %p52 = pneg %p46
      %p53 = scmp.eq.s32.totalorder %s16, 3
      %p54 = por %p52, %p53
      %p55 = scmp.ne.s32.totalorder %s47, %s50
      %p56 = scmp.eq.s32.totalorder %s16, 0
      %p57 = por %p55, %p56
      %p58 = scmp.ne.s32.totalorder %s47, %s50
      %p59 = scmp.eq.s32.totalorder %s21, 3
      %p60 = por %p58, %p59
      %p61 = scmp.ne.s32.totalorder %s50, %s51
      %p62 = scmp.eq.s32.totalorder %s21, 0
      %p63 = por %p61, %p62
      %p64 = scmp.ne.s32.totalorder %s50, %s51
      %p65 = scmp.eq.s32.totalorder %s22, 3
      %p66 = por %p64, %p65
      %p68 = scmp.ne.s32.totalorder %s51, %s67
      %p69 = scmp.eq.s32.totalorder %s22, 0
      %p70 = por %p68, %p69
      %s72 = sadd.s32 %s71, 1
      %p75 = scmp.eq.s32.totalorder %s16, 3
      %p76 = scmp.ne.s32.totalorder %s71, %s73
      %p77 = scmp.eq.s32.totalorder %s16, 0
      %p78 = por %p76, %p77
      %p79 = scmp.ne.s32.totalorder %s71, %s73
      %p80 = scmp.eq.s32.totalorder %s21, 3
      %p81 = por %p79, %p80
      %p82 = scmp.ne.s32.totalorder %s73, %s74
      %p83 = scmp.eq.s32.totalorder %s21, 0
      %p84 = por %p82, %p83
      %p85 = scmp.ne.s32.totalorder %s73, %s74
      %p86 = scmp.eq.s32.totalorder %s22, 3
      %p87 = por %p85, %p86
      %p89 = scmp.ne.s32.totalorder %s74, %s88
      %p90 = scmp.eq.s32.totalorder %s22, 0
      %p91 = por %p89, %p90
      %s92 = ssub.s32 %s16, %s23
      %p93 = scmp.eq.s32.totalorder %s92, 0
      %s95 = sadd.s32 %s94, 1
      %s96 = scalar_select %p93, %s94, %s95
      %p99 = pneg %p93
      %p100 = scmp.eq.s32.totalorder %s16, 3
      %p101 = por %p99, %p100
      %p102 = scmp.ne.s32.totalorder %s94, %s97
      %p103 = scmp.eq.s32.totalorder %s16, 0
      %p104 = por %p102, %p103
      %p105 = scmp.ne.s32.totalorder %s94, %s97
      %p106 = scmp.eq.s32.totalorder %s21, 3
      %p107 = por %p105, %p106
      %p108 = scmp.ne.s32.totalorder %s97, %s98
      %p109 = scmp.eq.s32.totalorder %s21, 0
      %p110 = por %p108, %p109
      %p111 = scmp.ne.s32.totalorder %s97, %s98
      %p112 = scmp.eq.s32.totalorder %s22, 3
      %p113 = por %p111, %p112
      %p115 = scmp.ne.s32.totalorder %s98, %s114
      %p116 = scmp.eq.s32.totalorder %s22, 0
      %p117 = por %p115, %p116
      %p118 = scmp.le.s32.totalorder 1, %s16
      %p119 = scmp.lt.s32.totalorder %s16, 5
      %p120 = pnand %p118, %p119
      %p121 = pneg %p120
      // Predicated region
      $region9: #{tpu_custom_call.1} parent=5 // pred_check
        _
      $region10: #{tpu_custom_call.1} parent=5 // pred_check_branch
        %123 = sbr.rel (%p120) target = $region12
      $region11: #{tpu_custom_call.1} parent=5 // pred_region
        %s124 = ssub.s32 %s16, 1
        // Predicated region
        $region13: #{tpu_custom_call.1} parent=11 // pred_check
          %p125 = pneg %p37
        $region14: #{tpu_custom_call.1} parent=11 // pred_check_branch
          %127 = sbr.rel (%p125) target = $region16
        $region15: #{tpu_custom_call.1} parent=11 // pred_region
          %s129 = ssub.s32 128, 128
          %130 = vsyncadd [#allocation3], %s129
          %s132 = sshll.u32 [#allocation2], 4
          %s133 = int_to_ptr.vmem [resolvable:$true] %s132
          %135 = dma.hbm_to_vmem [thread:$0]  %s0, 128, %s133, [#allocation3]
        $region16: #{tpu_custom_call.1} parent=11 // pred_fallthru
          _
        // Predicated region
        $region17: #{tpu_custom_call.1} parent=11 // pred_check
          %p136 = pneg %p84
        $region18: #{tpu_custom_call.1} parent=11 // pred_check_branch
          %138 = sbr.rel (%p136) target = $region20
        $region19: #{tpu_custom_call.1} parent=11 // pred_region
          %s140 = ssub.s32 256, 256
          %141 = vsyncadd [#allocation6], %s140
          %s142 = sshll.u32 [#allocation7], 4
          %s143 = int_to_ptr.vmem [resolvable:$true] %s142
          %148 = dma.hbm_to_vmem [thread:$0]  %s2, 256, %s143, [#allocation6], 128, 128, 8
        $region20: #{tpu_custom_call.1} parent=11 // pred_fallthru
          _
      $region12: #{tpu_custom_call.1} parent=5 // pred_fallthru
        _
      %p149 = scmp.lt.s32.totalorder %s16, 4
      // Predicated region
      $region21: #{tpu_custom_call.1} parent=5 // pred_check
        %p150 = pneg %p149
      $region22: #{tpu_custom_call.1} parent=5 // pred_check_branch
        %152 = sbr.rel (%p150) target = $region24
      $region23: #{tpu_custom_call.1} parent=5 // pred_region
        // Predicated region
        $region25: #{tpu_custom_call.1} parent=23 // pred_check
          %p153 = pneg %p57
        $region26: #{tpu_custom_call.1} parent=23 // pred_check_branch
          %155 = sbr.rel (%p153) target = $region28
        $region27: #{tpu_custom_call.1} parent=23 // pred_region
          %s156 = sand.u32 %s16, 1
          %s157 = scalar_lea.sflag [#allocation6], %s156
          %s158 = sand.u32 %s47, 1
          %s159 = smul.addr %s158, 32
          %s160 = scalar_lea.vmem [#allocation5], %s159
          %s161 = smul.u32 2, %s16
          %s163 = ssub.s32 512, 512
          %164 = vsyncadd %s157, %s163
          %s165 = smul.addr %s161, 2
          %s166 = smul.addr %s165, 128
          %s167 = scalar_lea.hbm %s1, %s166
          %s168 = sshll.u32 %s160, 4
          %s169 = int_to_ptr.vmem [resolvable:$true] %s168
          %174 = dma.hbm_to_vmem [thread:$0]  %s167, 512, %s169, %s157, 128, 128, 8
        $region28: #{tpu_custom_call.1} parent=23 // pred_fallthru
          _
      $region24: #{tpu_custom_call.1} parent=5 // pred_fallthru
        _
      %p175 = scmp.le.s32.totalorder 1, %s16
      %p176 = scmp.lt.s32.totalorder %s16, 5
      %p177 = pnand %p175, %p176
      %p178 = pneg %p177
      // Predicated region
      $region29: #{tpu_custom_call.1} parent=5 // pred_check
        _
      $region30: #{tpu_custom_call.1} parent=5 // pred_check_branch
        %180 = sbr.rel (%p177) target = $region32
      $region31: #{tpu_custom_call.1} parent=5 // pred_region
        %s181 = ssub.s32 %s16, 1
        // Predicated region
        $region33: #{tpu_custom_call.1} parent=31 // pred_check
          %p182 = pneg %p37
        $region34: #{tpu_custom_call.1} parent=31 // pred_check_branch
          %184 = sbr.rel (%p182) target = $region36
        $region35: #{tpu_custom_call.1} parent=31 // pred_region
          %185 = dma.done [#allocation3], 128
        $region36: #{tpu_custom_call.1} parent=31 // pred_fallthru
          _
        %s186 = sand.u32 %s21, 1
        %s187 = scalar_lea.sflag [#allocation6], %s186
        %s188 = sand.u32 %s50, 1
        %s189 = smul.addr %s188, 32
        %s190 = scalar_lea.vmem [#allocation5], %s189
        // Predicated region
        $region37: #{tpu_custom_call.1} parent=31 // pred_check
          %p191 = pneg %p63
        $region38: #{tpu_custom_call.1} parent=31 // pred_check_branch
          %193 = sbr.rel (%p191) target = $region40
        $region39: #{tpu_custom_call.1} parent=31 // pred_region
          %194 = dma.done %s187, 512
        $region40: #{tpu_custom_call.1} parent=31 // pred_fallthru
          _
        // Predicated region
        $region41: #{tpu_custom_call.1} parent=31 // pred_check
          %p195 = pneg %p84
        $region42: #{tpu_custom_call.1} parent=31 // pred_check_branch
          %197 = sbr.rel (%p195) target = $region44
        $region43: #{tpu_custom_call.1} parent=31 // pred_region
          %198 = dma.done [#allocation6], 256
        $region44: #{tpu_custom_call.1} parent=31 // pred_fallthru
          _
        %p199 = pneg %p37
        %p200 = pneg %p34
        %s201 = sand.u32 %s21, 1
        %s202 = scalar_lea.sflag [#allocation6], %s201
        %s203 = sand.u32 %s50, 1
        %s204 = smul.addr %s203, 32
        %s205 = scalar_lea.vmem [#allocation5], %s204
        %p206 = pneg %p63
        %p207 = pneg %p60
        %p208 = pneg %p84
        %p209 = pneg %p81
        %p210 = pneg %p110
        %p211 = pneg %p107
        %s212 = sand.u32 %s97, 1
        %s213 = scalar_lea.sflag [#allocation4], %s212
        %s214 = sand.u32 %s97, 1
        %s215 = smul.addr %s214, 8
        %s216 = scalar_lea.vmem [#allocation8], %s215
        %s217 = smul.u32 2, %s21
        %v218 = vld [vmem:[%s190] sm:$0xff]
        %v219 = vld [vmem:[%s190 + $0x8] sm:$0xff]
        %v220 = vld [vmem:[%s190 + $0x10] sm:$0xff]
        %v221 = vld [vmem:[%s190 + $0x18] sm:$0xff]
        %v222 = vld [vmem:[#allocation7] sm:$0xff]
        %v223 = vld [vmem:[#allocation7 + $0x8] sm:$0xff]
        %vm224 = vcmask 130048
        %v226 = vsel %vm224, %v218, 0
        %v229 = vsel %vm224, %v219, 0
        %v232 = vsel %vm224, %v220, 0
        %v235 = vsel %vm224, %v221, 0
        %237 = vmatprep.subr.mxu0 0.0
        %v238 = vand.u32 %v222, 4294901760
        %239 = vmatpush1.msra.mxu0 %v238
        %240 = vmatprep.subr.mxu0 0.0
        %v241 = vand.u32 %v223, 4294901760
        %242 = vmatpush1.msra.mxu0 %v241
        %243 = vmatprep.subr.mxu0 0.0
        %244 = vmatpush1.msra.mxu0 0.0
        %245 = vmatprep.subr.mxu0 0.0
        %246 = vmatpush1.msra.mxu0 0.0
        %247 = vmatprep.subr.mxu0 0.0
        %248 = vmatpush1.msra.mxu0 0.0
        %249 = vmatprep.subr.mxu0 0.0
        %250 = vmatpush1.msra.mxu0 0.0
        %251 = vmatprep.subr.mxu0 0.0
        %252 = vmatpush1.msra.mxu0 0.0
        %253 = vmatprep.subr.mxu0 0.0
        %254 = vmatpush1.msra.mxu0 0.0
        %255 = vmatprep.subr.mxu0 0.0
        %256 = vmatpush1.msra.mxu0 0.0
        %257 = vmatprep.subr.mxu0 0.0
        %258 = vmatpush1.msra.mxu0 0.0
        %259 = vmatprep.subr.mxu0 0.0
        %260 = vmatpush1.msra.mxu0 0.0
        %261 = vmatprep.subr.mxu0 0.0
        %262 = vmatpush1.msra.mxu0 0.0
        %263 = vmatprep.subr.mxu0 0.0
        %264 = vmatpush1.msra.mxu0 0.0
        %265 = vmatprep.subr.mxu0 0.0
        %266 = vmatpush1.msra.mxu0 0.0
        %267 = vmatprep.subr.mxu0 0.0
        %268 = vmatpush1.msra.mxu0 0.0
        %269 = vmatprep.subr.mxu0 0.0
        %270 = vmatpush1.msra.mxu0 0.0
        %271 = vmatprep.subr.mxu0 0.0
        %272 = vmatpush1.msra.mxu0 0.0
        %273 = vmatprep.subr.mxu0 0.0
        %274 = vmatpush1.msra.mxu0 0.0
        %275 = vmatprep.subr.mxu0 0.0
        %276 = vmatpush1.msra.mxu0 0.0
        %277 = vmatprep.subr.mxu0 0.0
        %278 = vmatpush1.msra.mxu0 0.0
        %279 = vmatprep.subr.mxu0 0.0
        %280 = vmatpush1.msra.mxu0 0.0
        %281 = vmatprep.subr.mxu0 0.0
        %282 = vmatpush1.msra.mxu0 0.0
        %283 = vmatprep.subr.mxu0 0.0
        %284 = vmatpush1.msra.mxu0 0.0
        %285 = vmatprep.subr.mxu0 0.0
        %286 = vmatpush1.msra.mxu0 0.0
        %287 = vmatprep.subr.mxu0 0.0
        %288 = vmatpush1.msra.mxu0 0.0
        %289 = vmatprep.subr.mxu0 0.0
        %290 = vmatpush1.msra.mxu0 0.0
        %291 = vmatprep.subr.mxu0 0.0
        %292 = vmatpush1.msra.mxu0 0.0
        %293 = vmatprep.subr.mxu0 0.0
        %294 = vmatpush1.msra.mxu0 0.0
        %295 = vmatprep.subr.mxu0 0.0
        %296 = vmatpush1.msra.mxu0 0.0
        %297 = vmatprep.subr.mxu0 0.0
        %298 = vmatpush1.msra.mxu0 0.0
        %299 = vmatprep.subr.mxu0 0.0
        %300 = vmatpush1.msra.mxu0 0.0
        %301 = vmatprep.subr.mxu0 0.0
        %302 = vmatpush1.msra.mxu0 0.0
        %303 = vmatprep.mubr.f32.mxu0 0.0
        %v304 = vand.u32 %v226, 4294901760
        %v305 = vsub.f32 %v226, %v304
        %v306 = vand.u32 %v305, 4294901760
        %v307 = vsub.f32 %v305, %v306
        %v308 = vand.u32 %v307, 4294901760
        %309 = vmatmul.mubr.f32.gmra.mrb[0].mxu0 %v308
        %v310 = vpop.f32.mrb[0].mxu0
        %v311 = vadd.f32 0.0, %v310
        %v312 = vpop.f32.mrb[0].mxu0
        %313 = vmatprep.mubr.f32.mxu0 0.0
        %v314 = vand.u32 %v229, 4294901760
        %v315 = vsub.f32 %v229, %v314
        %v316 = vand.u32 %v315, 4294901760
        %v317 = vsub.f32 %v315, %v316
        %v318 = vand.u32 %v317, 4294901760
        %319 = vmatmul.mubr.f32.gmra.mrb[0].mxu0 %v318
        %v320 = vpop.f32.mrb[0].mxu0
        %v321 = vadd.f32 0.0, %v320
        %v322 = vpop.f32.mrb[0].mxu0
        %323 = vmatprep.mubr.f32.mxu0 0.0
        %v324 = vand.u32 %v232, 4294901760
        %v325 = vsub.f32 %v232, %v324
        %v326 = vand.u32 %v325, 4294901760
        %v327 = vsub.f32 %v325, %v326
        %v328 = vand.u32 %v327, 4294901760
        %329 = vmatmul.mubr.f32.gmra.mrb[0].mxu0 %v328
        %v330 = vpop.f32.mrb[0].mxu0
        %v331 = vadd.f32 0.0, %v330
        %v332 = vpop.f32.mrb[0].mxu0
        %333 = vmatprep.mubr.f32.mxu0 0.0
        %v334 = vand.u32 %v235, 4294901760
        %v335 = vsub.f32 %v235, %v334
        %v336 = vand.u32 %v335, 4294901760
        %v337 = vsub.f32 %v335, %v336
        %v338 = vand.u32 %v337, 4294901760
        %339 = vmatmul.mubr.f32.gmra.mrb[0].mxu0 %v338
        %v340 = vpop.f32.mrb[0].mxu0
        %v341 = vadd.f32 0.0, %v340
        %v342 = vpop.f32.mrb[0].mxu0
        %343 = vdwg.mxu0
        %344 = vmatprep.subr.mxu0 0.0
        %v345 = vand.u32 %v222, 4294901760
        %v346 = vsub.f32 %v222, %v345
        %v347 = vand.u32 %v346, 4294901760
        %v348 = vsub.f32 %v346, %v347
        %v349 = vand.u32 %v348, 4294901760
        %350 = vmatpush1.msra.mxu0 %v349
        %351 = vmatprep.subr.mxu0 0.0
        %v352 = vand.u32 %v223, 4294901760
        %v353 = vsub.f32 %v223, %v352
        %v354 = vand.u32 %v353, 4294901760
        %v355 = vsub.f32 %v353, %v354
        %v356 = vand.u32 %v355, 4294901760
        %357 = vmatpush1.msra.mxu0 %v356
        %358 = vmatprep.subr.mxu0 0.0
        %359 = vmatpush1.msra.mxu0 0.0
        %360 = vmatprep.subr.mxu0 0.0
        %361 = vmatpush1.msra.mxu0 0.0
        %362 = vmatprep.subr.mxu0 0.0
        %363 = vmatpush1.msra.mxu0 0.0
        %364 = vmatprep.subr.mxu0 0.0
        %365 = vmatpush1.msra.mxu0 0.0
        %366 = vmatprep.subr.mxu0 0.0
        %367 = vmatpush1.msra.mxu0 0.0
        %368 = vmatprep.subr.mxu0 0.0
        %369 = vmatpush1.msra.mxu0 0.0
        %370 = vmatprep.subr.mxu0 0.0
        %371 = vmatpush1.msra.mxu0 0.0
        %372 = vmatprep.subr.mxu0 0.0
        %373 = vmatpush1.msra.mxu0 0.0
        %374 = vmatprep.subr.mxu0 0.0
        %375 = vmatpush1.msra.mxu0 0.0
        %376 = vmatprep.subr.mxu0 0.0
        %377 = vmatpush1.msra.mxu0 0.0
        %378 = vmatprep.subr.mxu0 0.0
        %379 = vmatpush1.msra.mxu0 0.0
        %380 = vmatprep.subr.mxu0 0.0
        %381 = vmatpush1.msra.mxu0 0.0
        %382 = vmatprep.subr.mxu0 0.0
        %383 = vmatpush1.msra.mxu0 0.0
        %384 = vmatprep.subr.mxu0 0.0
        %385 = vmatpush1.msra.mxu0 0.0
        %386 = vmatprep.subr.mxu0 0.0
        %387 = vmatpush1.msra.mxu0 0.0
        %388 = vmatprep.subr.mxu0 0.0
        %389 = vmatpush1.msra.mxu0 0.0
        %390 = vmatprep.subr.mxu0 0.0
        %391 = vmatpush1.msra.mxu0 0.0
        %392 = vmatprep.subr.mxu0 0.0
        %393 = vmatpush1.msra.mxu0 0.0
        %394 = vmatprep.subr.mxu0 0.0
        %395 = vmatpush1.msra.mxu0 0.0
        %396 = vmatprep.subr.mxu0 0.0
        %397 = vmatpush1.msra.mxu0 0.0
        %398 = vmatprep.subr.mxu0 0.0
        %399 = vmatpush1.msra.mxu0 0.0
        %400 = vmatprep.subr.mxu0 0.0
        %401 = vmatpush1.msra.mxu0 0.0
        %402 = vmatprep.subr.mxu0 0.0
        %403 = vmatpush1.msra.mxu0 0.0
        %404 = vmatprep.subr.mxu0 0.0
        %405 = vmatpush1.msra.mxu0 0.0
        %406 = vmatprep.subr.mxu0 0.0
        %407 = vmatpush1.msra.mxu0 0.0
        %408 = vmatprep.subr.mxu0 0.0
        %409 = vmatpush1.msra.mxu0 0.0
        %410 = vmatprep.subr.mxu0 0.0
        %411 = vmatpush1.msra.mxu0 0.0
        %412 = vmatprep.subr.mxu0 0.0
        %413 = vmatpush1.msra.mxu0 0.0
        %414 = vmatprep.subr.mxu0 0.0
        %415 = vmatpush1.msra.mxu0 0.0
        %416 = vmatprep.subr.mxu0 0.0
        %417 = vmatpush1.msra.mxu0 0.0
        %418 = vmatprep.mubr.f32.mxu0 0.0
        %v419 = vand.u32 %v226, 4294901760
        %420 = vmatmul.mubr.f32.gmra.mrb[0].mxu0 %v419
        %v421 = vpop.f32.mrb[0].mxu0
        %v422 = vadd.f32 %v311, %v421
        %v423 = vpop.f32.mrb[0].mxu0
        %424 = vmatprep.mubr.f32.mxu0 0.0
        %v425 = vand.u32 %v229, 4294901760
        %426 = vmatmul.mubr.f32.gmra.mrb[0].mxu0 %v425
        %v427 = vpop.f32.mrb[0].mxu0
        %v428 = vadd.f32 %v321, %v427
        %v429 = vpop.f32.mrb[0].mxu0
        %430 = vmatprep.mubr.f32.mxu0 0.0
        %v431 = vand.u32 %v232, 4294901760
        %432 = vmatmul.mubr.f32.gmra.mrb[0].mxu0 %v431
        %v433 = vpop.f32.mrb[0].mxu0
        %v434 = vadd.f32 %v331, %v433
        %v435 = vpop.f32.mrb[0].mxu0
        %436 = vmatprep.mubr.f32.mxu0 0.0
        %v437 = vand.u32 %v235, 4294901760
        %438 = vmatmul.mubr.f32.gmra.mrb[0].mxu0 %v437
        %v439 = vpop.f32.mrb[0].mxu0
        %v440 = vadd.f32 %v341, %v439
        %v441 = vpop.f32.mrb[0].mxu0
        %442 = vdwg.mxu0
        %443 = vmatprep.subr.mxu0 0.0
        %v444 = vand.u32 %v222, 4294901760
        %v445 = vsub.f32 %v222, %v444
        %446 = vmatpush1.msra.mxu0 %v445
        %447 = vmatprep.subr.mxu0 0.0
        %v448 = vand.u32 %v223, 4294901760
        %v449 = vsub.f32 %v223, %v448
        %450 = vmatpush1.msra.mxu0 %v449
        %451 = vmatprep.subr.mxu0 0.0
        %452 = vmatpush1.msra.mxu0 0.0
        %453 = vmatprep.subr.mxu0 0.0
        %454 = vmatpush1.msra.mxu0 0.0
        %455 = vmatprep.subr.mxu0 0.0
        %456 = vmatpush1.msra.mxu0 0.0
        %457 = vmatprep.subr.mxu0 0.0
        %458 = vmatpush1.msra.mxu0 0.0
        %459 = vmatprep.subr.mxu0 0.0
        %460 = vmatpush1.msra.mxu0 0.0
        %461 = vmatprep.subr.mxu0 0.0
        %462 = vmatpush1.msra.mxu0 0.0
        %463 = vmatprep.subr.mxu0 0.0
        %464 = vmatpush1.msra.mxu0 0.0
        %465 = vmatprep.subr.mxu0 0.0
        %466 = vmatpush1.msra.mxu0 0.0
        %467 = vmatprep.subr.mxu0 0.0
        %468 = vmatpush1.msra.mxu0 0.0
        %469 = vmatprep.subr.mxu0 0.0
        %470 = vmatpush1.msra.mxu0 0.0
        %471 = vmatprep.subr.mxu0 0.0
        %472 = vmatpush1.msra.mxu0 0.0
        %473 = vmatprep.subr.mxu0 0.0
        %474 = vmatpush1.msra.mxu0 0.0
        %475 = vmatprep.subr.mxu0 0.0
        %476 = vmatpush1.msra.mxu0 0.0
        %477 = vmatprep.subr.mxu0 0.0
        %478 = vmatpush1.msra.mxu0 0.0
        %479 = vmatprep.subr.mxu0 0.0
        %480 = vmatpush1.msra.mxu0 0.0
        %481 = vmatprep.subr.mxu0 0.0
        %482 = vmatpush1.msra.mxu0 0.0
        %483 = vmatprep.subr.mxu0 0.0
        %484 = vmatpush1.msra.mxu0 0.0
        %485 = vmatprep.subr.mxu0 0.0
        %486 = vmatpush1.msra.mxu0 0.0
        %487 = vmatprep.subr.mxu0 0.0
        %488 = vmatpush1.msra.mxu0 0.0
        %489 = vmatprep.subr.mxu0 0.0
        %490 = vmatpush1.msra.mxu0 0.0
        %491 = vmatprep.subr.mxu0 0.0
        %492 = vmatpush1.msra.mxu0 0.0
        %493 = vmatprep.subr.mxu0 0.0
        %494 = vmatpush1.msra.mxu0 0.0
        %495 = vmatprep.subr.mxu0 0.0
        %496 = vmatpush1.msra.mxu0 0.0
        %497 = vmatprep.subr.mxu0 0.0
        %498 = vmatpush1.msra.mxu0 0.0
        %499 = vmatprep.subr.mxu0 0.0
        %500 = vmatpush1.msra.mxu0 0.0
        %501 = vmatprep.subr.mxu0 0.0
        %502 = vmatpush1.msra.mxu0 0.0
        %503 = vmatprep.subr.mxu0 0.0
        %504 = vmatpush1.msra.mxu0 0.0
        %505 = vmatprep.subr.mxu0 0.0
        %506 = vmatpush1.msra.mxu0 0.0
        %507 = vmatprep.subr.mxu0 0.0
        %508 = vmatpush1.msra.mxu0 0.0
        %509 = vmatprep.subr.mxu0 0.0
        %510 = vmatpush1.msra.mxu0 0.0
        %511 = vmatprep.mubr.f32.mxu0 0.0
        %v512 = vand.u32 %v226, 4294901760
        %v513 = vsub.f32 %v226, %v512
        %514 = vmatmul.mubr.f32.gmra.mrb[0].mxu0 %v513
        %v515 = vpop.f32.mrb[0].mxu0
        %v516 = vadd.f32 %v422, %v515
        %v517 = vpop.f32.mrb[0].mxu0
        %518 = vmatprep.mubr.f32.mxu0 0.0
        %v519 = vand.u32 %v229, 4294901760
        %v520 = vsub.f32 %v229, %v519
        %521 = vmatmul.mubr.f32.gmra.mrb[0].mxu0 %v520
        %v522 = vpop.f32.mrb[0].mxu0
        %v523 = vadd.f32 %v428, %v522
        %v524 = vpop.f32.mrb[0].mxu0
        %525 = vmatprep.mubr.f32.mxu0 0.0
        %v526 = vand.u32 %v232, 4294901760
        %v527 = vsub.f32 %v232, %v526
        %528 = vmatmul.mubr.f32.gmra.mrb[0].mxu0 %v527
        %v529 = vpop.f32.mrb[0].mxu0
        %v530 = vadd.f32 %v434, %v529
        %v531 = vpop.f32.mrb[0].mxu0
        %532 = vmatprep.mubr.f32.mxu0 0.0
        %v533 = vand.u32 %v235, 4294901760
        %v534 = vsub.f32 %v235, %v533
        %535 = vmatmul.mubr.f32.gmra.mrb[0].mxu0 %v534
        %v536 = vpop.f32.mrb[0].mxu0
        %v537 = vadd.f32 %v440, %v536
        %v538 = vpop.f32.mrb[0].mxu0
        %539 = vdwg.mxu0
        %540 = vmatprep.subr.mxu0 0.0
        %v541 = vand.u32 %v222, 4294901760
        %542 = vmatpush1.msra.mxu0 %v541
        %543 = vmatprep.subr.mxu0 0.0
        %v544 = vand.u32 %v223, 4294901760
        %545 = vmatpush1.msra.mxu0 %v544
        %546 = vmatprep.subr.mxu0 0.0
        %547 = vmatpush1.msra.mxu0 0.0
        %548 = vmatprep.subr.mxu0 0.0
        %549 = vmatpush1.msra.mxu0 0.0
        %550 = vmatprep.subr.mxu0 0.0
        %551 = vmatpush1.msra.mxu0 0.0
        %552 = vmatprep.subr.mxu0 0.0
        %553 = vmatpush1.msra.mxu0 0.0
        %554 = vmatprep.subr.mxu0 0.0
        %555 = vmatpush1.msra.mxu0 0.0
        %556 = vmatprep.subr.mxu0 0.0
        %557 = vmatpush1.msra.mxu0 0.0
        %558 = vmatprep.subr.mxu0 0.0
        %559 = vmatpush1.msra.mxu0 0.0
        %560 = vmatprep.subr.mxu0 0.0
        %561 = vmatpush1.msra.mxu0 0.0
        %562 = vmatprep.subr.mxu0 0.0
        %563 = vmatpush1.msra.mxu0 0.0
        %564 = vmatprep.subr.mxu0 0.0
        %565 = vmatpush1.msra.mxu0 0.0
        %566 = vmatprep.subr.mxu0 0.0
        %567 = vmatpush1.msra.mxu0 0.0
        %568 = vmatprep.subr.mxu0 0.0
        %569 = vmatpush1.msra.mxu0 0.0
        %570 = vmatprep.subr.mxu0 0.0
        %571 = vmatpush1.msra.mxu0 0.0
        %572 = vmatprep.subr.mxu0 0.0
        %573 = vmatpush1.msra.mxu0 0.0
        %574 = vmatprep.subr.mxu0 0.0
        %575 = vmatpush1.msra.mxu0 0.0
        %576 = vmatprep.subr.mxu0 0.0
        %577 = vmatpush1.msra.mxu0 0.0
        %578 = vmatprep.subr.mxu0 0.0
        %579 = vmatpush1.msra.mxu0 0.0
        %580 = vmatprep.subr.mxu0 0.0
        %581 = vmatpush1.msra.mxu0 0.0
        %582 = vmatprep.subr.mxu0 0.0
        %583 = vmatpush1.msra.mxu0 0.0
        %584 = vmatprep.subr.mxu0 0.0
        %585 = vmatpush1.msra.mxu0 0.0
        %586 = vmatprep.subr.mxu0 0.0
        %587 = vmatpush1.msra.mxu0 0.0
        %588 = vmatprep.subr.mxu0 0.0
        %589 = vmatpush1.msra.mxu0 0.0
        %590 = vmatprep.subr.mxu0 0.0
        %591 = vmatpush1.msra.mxu0 0.0
        %592 = vmatprep.subr.mxu0 0.0
        %593 = vmatpush1.msra.mxu0 0.0
        %594 = vmatprep.subr.mxu0 0.0
        %595 = vmatpush1.msra.mxu0 0.0
        %596 = vmatprep.subr.mxu0 0.0
        %597 = vmatpush1.msra.mxu0 0.0
        %598 = vmatprep.subr.mxu0 0.0
        %599 = vmatpush1.msra.mxu0 0.0
        %600 = vmatprep.subr.mxu0 0.0
        %601 = vmatpush1.msra.mxu0 0.0
        %602 = vmatprep.subr.mxu0 0.0
        %603 = vmatpush1.msra.mxu0 0.0
        %604 = vmatprep.subr.mxu0 0.0
        %605 = vmatpush1.msra.mxu0 0.0
        %606 = vmatprep.mubr.f32.mxu0 0.0
        %v607 = vand.u32 %v226, 4294901760
        %v608 = vsub.f32 %v226, %v607
        %v609 = vand.u32 %v608, 4294901760
        %610 = vmatmul.mubr.f32.gmra.mrb[0].mxu0 %v609
        %v611 = vpop.f32.mrb[0].mxu0
        %v612 = vadd.f32 %v516, %v611
        %v613 = vpop.f32.mrb[0].mxu0
        %614 = vmatprep.mubr.f32.mxu0 0.0
        %v615 = vand.u32 %v229, 4294901760
        %v616 = vsub.f32 %v229, %v615
        %v617 = vand.u32 %v616, 4294901760
        %618 = vmatmul.mubr.f32.gmra.mrb[0].mxu0 %v617
        %v619 = vpop.f32.mrb[0].mxu0
        %v620 = vadd.f32 %v523, %v619
        %v621 = vpop.f32.mrb[0].mxu0
        %622 = vmatprep.mubr.f32.mxu0 0.0
        %v623 = vand.u32 %v232, 4294901760
        %v624 = vsub.f32 %v232, %v623
        %v625 = vand.u32 %v624, 4294901760
        %626 = vmatmul.mubr.f32.gmra.mrb[0].mxu0 %v625
        %v627 = vpop.f32.mrb[0].mxu0
        %v628 = vadd.f32 %v530, %v627
        %v629 = vpop.f32.mrb[0].mxu0
        %630 = vmatprep.mubr.f32.mxu0 0.0
        %v631 = vand.u32 %v235, 4294901760
        %v632 = vsub.f32 %v235, %v631
        %v633 = vand.u32 %v632, 4294901760
        %634 = vmatmul.mubr.f32.gmra.mrb[0].mxu0 %v633
        %v635 = vpop.f32.mrb[0].mxu0
        %v636 = vadd.f32 %v537, %v635
        %v637 = vpop.f32.mrb[0].mxu0
        %638 = vdwg.mxu0
        %639 = vmatprep.subr.mxu0 0.0
        %v640 = vand.u32 %v222, 4294901760
        %v641 = vsub.f32 %v222, %v640
        %v642 = vand.u32 %v641, 4294901760
        %643 = vmatpush1.msra.mxu0 %v642
        %644 = vmatprep.subr.mxu0 0.0
        %v645 = vand.u32 %v223, 4294901760
        %v646 = vsub.f32 %v223, %v645
        %v647 = vand.u32 %v646, 4294901760
        %648 = vmatpush1.msra.mxu0 %v647
        %649 = vmatprep.subr.mxu0 0.0
        %650 = vmatpush1.msra.mxu0 0.0
        %651 = vmatprep.subr.mxu0 0.0
        %652 = vmatpush1.msra.mxu0 0.0
        %653 = vmatprep.subr.mxu0 0.0
        %654 = vmatpush1.msra.mxu0 0.0
        %655 = vmatprep.subr.mxu0 0.0
        %656 = vmatpush1.msra.mxu0 0.0
        %657 = vmatprep.subr.mxu0 0.0
        %658 = vmatpush1.msra.mxu0 0.0
        %659 = vmatprep.subr.mxu0 0.0
        %660 = vmatpush1.msra.mxu0 0.0
        %661 = vmatprep.subr.mxu0 0.0
        %662 = vmatpush1.msra.mxu0 0.0
        %663 = vmatprep.subr.mxu0 0.0
        %664 = vmatpush1.msra.mxu0 0.0
        %665 = vmatprep.subr.mxu0 0.0
        %666 = vmatpush1.msra.mxu0 0.0
        %667 = vmatprep.subr.mxu0 0.0
        %668 = vmatpush1.msra.mxu0 0.0
        %669 = vmatprep.subr.mxu0 0.0
        %670 = vmatpush1.msra.mxu0 0.0
        %671 = vmatprep.subr.mxu0 0.0
        %672 = vmatpush1.msra.mxu0 0.0
        %673 = vmatprep.subr.mxu0 0.0
        %674 = vmatpush1.msra.mxu0 0.0
        %675 = vmatprep.subr.mxu0 0.0
        %676 = vmatpush1.msra.mxu0 0.0
        %677 = vmatprep.subr.mxu0 0.0
        %678 = vmatpush1.msra.mxu0 0.0
        %679 = vmatprep.subr.mxu0 0.0
        %680 = vmatpush1.msra.mxu0 0.0
        %681 = vmatprep.subr.mxu0 0.0
        %682 = vmatpush1.msra.mxu0 0.0
        %683 = vmatprep.subr.mxu0 0.0
        %684 = vmatpush1.msra.mxu0 0.0
        %685 = vmatprep.subr.mxu0 0.0
        %686 = vmatpush1.msra.mxu0 0.0
        %687 = vmatprep.subr.mxu0 0.0
        %688 = vmatpush1.msra.mxu0 0.0
        %689 = vmatprep.subr.mxu0 0.0
        %690 = vmatpush1.msra.mxu0 0.0
        %691 = vmatprep.subr.mxu0 0.0
        %692 = vmatpush1.msra.mxu0 0.0
        %693 = vmatprep.subr.mxu0 0.0
        %694 = vmatpush1.msra.mxu0 0.0
        %695 = vmatprep.subr.mxu0 0.0
        %696 = vmatpush1.msra.mxu0 0.0
        %697 = vmatprep.subr.mxu0 0.0
        %698 = vmatpush1.msra.mxu0 0.0
        %699 = vmatprep.subr.mxu0 0.0
        %700 = vmatpush1.msra.mxu0 0.0
        %701 = vmatprep.subr.mxu0 0.0
        %702 = vmatpush1.msra.mxu0 0.0
        %703 = vmatprep.subr.mxu0 0.0
        %704 = vmatpush1.msra.mxu0 0.0
        %705 = vmatprep.subr.mxu0 0.0
        %706 = vmatpush1.msra.mxu0 0.0
        %707 = vmatprep.subr.mxu0 0.0
        %708 = vmatpush1.msra.mxu0 0.0
        %709 = vmatprep.mubr.f32.mxu0 0.0
        %v710 = vand.u32 %v226, 4294901760
        %711 = vmatmul.mubr.f32.gmra.mrb[0].mxu0 %v710
        %v712 = vpop.f32.mrb[0].mxu0
        %v713 = vadd.f32 %v612, %v712
        %v714 = vpop.f32.mrb[0].mxu0
        %715 = vmatprep.mubr.f32.mxu0 0.0
        %v716 = vand.u32 %v229, 4294901760
        %717 = vmatmul.mubr.f32.gmra.mrb[0].mxu0 %v716
        %v718 = vpop.f32.mrb[0].mxu0
        %v719 = vadd.f32 %v620, %v718
        %v720 = vpop.f32.mrb[0].mxu0
        %721 = vmatprep.mubr.f32.mxu0 0.0
        %v722 = vand.u32 %v232, 4294901760
        %723 = vmatmul.mubr.f32.gmra.mrb[0].mxu0 %v722
        %v724 = vpop.f32.mrb[0].mxu0
        %v725 = vadd.f32 %v628, %v724
        %v726 = vpop.f32.mrb[0].mxu0
        %727 = vmatprep.mubr.f32.mxu0 0.0
        %v728 = vand.u32 %v235, 4294901760
        %729 = vmatmul.mubr.f32.gmra.mrb[0].mxu0 %v728
        %v730 = vpop.f32.mrb[0].mxu0
        %v731 = vadd.f32 %v636, %v730
        %v732 = vpop.f32.mrb[0].mxu0
        %733 = vdwg.mxu0
        %734 = vmatprep.subr.mxu0 0.0
        %v735 = vand.u32 %v222, 4294901760
        %736 = vmatpush1.msra.mxu0 %v735
        %737 = vmatprep.subr.mxu0 0.0
        %v738 = vand.u32 %v223, 4294901760
        %739 = vmatpush1.msra.mxu0 %v738
        %740 = vmatprep.subr.mxu0 0.0
        %741 = vmatpush1.msra.mxu0 0.0
        %742 = vmatprep.subr.mxu0 0.0
        %743 = vmatpush1.msra.mxu0 0.0
        %744 = vmatprep.subr.mxu0 0.0
        %745 = vmatpush1.msra.mxu0 0.0
        %746 = vmatprep.subr.mxu0 0.0
        %747 = vmatpush1.msra.mxu0 0.0
        %748 = vmatprep.subr.mxu0 0.0
        %749 = vmatpush1.msra.mxu0 0.0
        %750 = vmatprep.subr.mxu0 0.0
        %751 = vmatpush1.msra.mxu0 0.0
        %752 = vmatprep.subr.mxu0 0.0
        %753 = vmatpush1.msra.mxu0 0.0
        %754 = vmatprep.subr.mxu0 0.0
        %755 = vmatpush1.msra.mxu0 0.0
        %756 = vmatprep.subr.mxu0 0.0
        %757 = vmatpush1.msra.mxu0 0.0
        %758 = vmatprep.subr.mxu0 0.0
        %759 = vmatpush1.msra.mxu0 0.0
        %760 = vmatprep.subr.mxu0 0.0
        %761 = vmatpush1.msra.mxu0 0.0
        %762 = vmatprep.subr.mxu0 0.0
        %763 = vmatpush1.msra.mxu0 0.0
        %764 = vmatprep.subr.mxu0 0.0
        %765 = vmatpush1.msra.mxu0 0.0
        %766 = vmatprep.subr.mxu0 0.0
        %767 = vmatpush1.msra.mxu0 0.0
        %768 = vmatprep.subr.mxu0 0.0
        %769 = vmatpush1.msra.mxu0 0.0
        %770 = vmatprep.subr.mxu0 0.0
        %771 = vmatpush1.msra.mxu0 0.0
        %772 = vmatprep.subr.mxu0 0.0
        %773 = vmatpush1.msra.mxu0 0.0
        %774 = vmatprep.subr.mxu0 0.0
        %775 = vmatpush1.msra.mxu0 0.0
        %776 = vmatprep.subr.mxu0 0.0
        %777 = vmatpush1.msra.mxu0 0.0
        %778 = vmatprep.subr.mxu0 0.0
        %779 = vmatpush1.msra.mxu0 0.0
        %780 = vmatprep.subr.mxu0 0.0
        %781 = vmatpush1.msra.mxu0 0.0
        %782 = vmatprep.subr.mxu0 0.0
        %783 = vmatpush1.msra.mxu0 0.0
        %784 = vmatprep.subr.mxu0 0.0
        %785 = vmatpush1.msra.mxu0 0.0
        %786 = vmatprep.subr.mxu0 0.0
        %787 = vmatpush1.msra.mxu0 0.0
        %788 = vmatprep.subr.mxu0 0.0
        %789 = vmatpush1.msra.mxu0 0.0
        %790 = vmatprep.subr.mxu0 0.0
        %791 = vmatpush1.msra.mxu0 0.0
        %792 = vmatprep.subr.mxu0 0.0
        %793 = vmatpush1.msra.mxu0 0.0
        %794 = vmatprep.subr.mxu0 0.0
        %795 = vmatpush1.msra.mxu0 0.0
        %796 = vmatprep.subr.mxu0 0.0
        %797 = vmatpush1.msra.mxu0 0.0
        %798 = vmatprep.subr.mxu0 0.0
        %799 = vmatpush1.msra.mxu0 0.0
        %800 = vmatprep.mubr.f32.mxu0 0.0
        %v801 = vand.u32 %v226, 4294901760
        %802 = vmatmul.mubr.f32.gmra.mrb[0].mxu0 %v801
        %v803 = vpop.f32.mrb[0].mxu0
        %v804 = vadd.f32 %v713, %v803
        %v805 = vpop.f32.mrb[0].mxu0
        %806 = vmatprep.mubr.f32.mxu0 0.0
        %v807 = vand.u32 %v229, 4294901760
        %808 = vmatmul.mubr.f32.gmra.mrb[0].mxu0 %v807
        %v809 = vpop.f32.mrb[0].mxu0
        %v810 = vadd.f32 %v719, %v809
        %v811 = vpop.f32.mrb[0].mxu0
        %812 = vmatprep.mubr.f32.mxu0 0.0
        %v813 = vand.u32 %v232, 4294901760
        %814 = vmatmul.mubr.f32.gmra.mrb[0].mxu0 %v813
        %v815 = vpop.f32.mrb[0].mxu0
        %v816 = vadd.f32 %v725, %v815
        %v817 = vpop.f32.mrb[0].mxu0
        %818 = vmatprep.mubr.f32.mxu0 0.0
        %v819 = vand.u32 %v235, 4294901760
        %820 = vmatmul.mubr.f32.gmra.mrb[0].mxu0 %v819
        %v821 = vpop.f32.mrb[0].mxu0
        %v822 = vadd.f32 %v731, %v821
        %v823 = vpop.f32.mrb[0].mxu0
        %824 = vdwg.mxu0
        %v825 = vcombine.high %v804, 0.0
        %v827 = vunpack.c.l.s4 1983009808
        %v828 = vunpack.c.0.s8 %v827
        %v829 = vlaneseq
        %v830 = vshrl.u32 %v829, 7
        %v831 = vsub.s32 %v828, %v830
        %v832 = vrot.slane %v804, %v831
        %v834 = vunpack.c.l.s4 1983009808
        %v835 = vunpack.c.0.s8 %v834
        %v836 = vlaneseq
        %v837 = vshrl.u32 %v836, 7
        %v838 = vsub.s32 %v835, %v837
        %v839 = vrot.slane %v825, %v838
        %v840 = vcombine.high %v816, 0.0
        %v842 = vunpack.c.l.s4 1983009808
        %v843 = vunpack.c.0.s8 %v842
        %v844 = vlaneseq
        %v845 = vshrl.u32 %v844, 7
        %v846 = vsub.s32 %v843, %v845
        %v847 = vrot.slane %v816, %v846
        %v849 = vunpack.c.l.s4 1983009808
        %v850 = vunpack.c.0.s8 %v849
        %v851 = vlaneseq
        %v852 = vshrl.u32 %v851, 7
        %v853 = vsub.s32 %v850, %v852
        %v854 = vrot.slane %v840, %v853
        %v855 = vcombine.low %v832, %v847
        %v856 = vcombine.high %v832, %v847
        %v858 = vunpack.c.l.s4 1934713408
        %v859 = vunpack.c.0.s8 %v858
        %v860 = vlaneseq
        %v861 = vshrl.u32 %v860, 7
        %v862 = vsub.s32 %v859, %v861
        %v863 = vrot.slane %v855, %v862
        %v865 = vunpack.c.l.s4 1934713408
        %v866 = vunpack.c.0.s8 %v865
        %v867 = vlaneseq
        %v868 = vshrl.u32 %v867, 7
        %v869 = vsub.s32 %v866, %v868
        %v870 = vrot.slane %v856, %v869
        %v871 = vcombine.low %v839, %v854
        %v872 = vcombine.high %v839, %v854
        %v874 = vunpack.c.l.s4 1934713408
        %v875 = vunpack.c.0.s8 %v874
        %v876 = vlaneseq
        %v877 = vshrl.u32 %v876, 7
        %v878 = vsub.s32 %v875, %v877
        %v879 = vrot.slane %v871, %v878
        %v881 = vunpack.c.l.s4 1934713408
        %v882 = vunpack.c.0.s8 %v881
        %v883 = vlaneseq
        %v884 = vshrl.u32 %v883, 7
        %v885 = vsub.s32 %v882, %v884
        %v886 = vrot.slane %v872, %v885
        %v887 = vcombine.high %v863, 0.0
        %v888 = vcombine.high %v870, 0.0
        %v889 = vcombine.high %v879, 0.0
        %v890 = vcombine.high %v886, 0.0
        %v891 = vcombine.high %v810, 0.0
        %v893 = vunpack.c.l.s4 1983009808
        %v894 = vunpack.c.0.s8 %v893
        %v895 = vlaneseq
        %v896 = vshrl.u32 %v895, 7
        %v897 = vsub.s32 %v894, %v896
        %v898 = vrot.slane %v810, %v897
        %v900 = vunpack.c.l.s4 1983009808
        %v901 = vunpack.c.0.s8 %v900
        %v902 = vlaneseq
        %v903 = vshrl.u32 %v902, 7
        %v904 = vsub.s32 %v901, %v903
        %v905 = vrot.slane %v891, %v904
        %v906 = vcombine.high %v822, 0.0
        %v908 = vunpack.c.l.s4 1983009808
        %v909 = vunpack.c.0.s8 %v908
        %v910 = vlaneseq
        %v911 = vshrl.u32 %v910, 7
        %v912 = vsub.s32 %v909, %v911
        %v913 = vrot.slane %v822, %v912
        %v915 = vunpack.c.l.s4 1983009808
        %v916 = vunpack.c.0.s8 %v915
        %v917 = vlaneseq
        %v918 = vshrl.u32 %v917, 7
        %v919 = vsub.s32 %v916, %v918
        %v920 = vrot.slane %v906, %v919
        %v921 = vcombine.low %v898, %v913
        %v922 = vcombine.high %v898, %v913
        %v924 = vunpack.c.l.s4 1934713408
        %v925 = vunpack.c.0.s8 %v924
        %v926 = vlaneseq
        %v927 = vshrl.u32 %v926, 7
        %v928 = vsub.s32 %v925, %v927
        %v929 = vrot.slane %v921, %v928
        %v931 = vunpack.c.l.s4 1934713408
        %v932 = vunpack.c.0.s8 %v931
        %v933 = vlaneseq
        %v934 = vshrl.u32 %v933, 7
        %v935 = vsub.s32 %v932, %v934
        %v936 = vrot.slane %v922, %v935
        %v937 = vcombine.low %v905, %v920
        %v938 = vcombine.high %v905, %v920
        %v940 = vunpack.c.l.s4 1934713408
        %v941 = vunpack.c.0.s8 %v940
        %v942 = vlaneseq
        %v943 = vshrl.u32 %v942, 7
        %v944 = vsub.s32 %v941, %v943
        %v945 = vrot.slane %v937, %v944
        %v947 = vunpack.c.l.s4 1934713408
        %v948 = vunpack.c.0.s8 %v947
        %v949 = vlaneseq
        %v950 = vshrl.u32 %v949, 7
        %v951 = vsub.s32 %v948, %v950
        %v952 = vrot.slane %v938, %v951
        %v953 = vcombine.high %v929, 0.0
        %v954 = vcombine.high %v936, 0.0
        %v955 = vcombine.high %v945, 0.0
        %v956 = vcombine.high %v952, 0.0
        %v957 = vcombine.low %v863, %v870
        %v959 = vunpack.c.l.s4 1983009808
        %v960 = vunpack.c.0.s8 %v959
        %v961 = vlaneseq
        %v962 = vshrl.u32 %v961, 7
        %v963 = vsub.s32 %v960, %v962
        %v964 = vrot.slane %v957, %v963
        %v965 = vcombine.low %v887, %v888
        %v967 = vunpack.c.l.s4 1983009808
        %v968 = vunpack.c.0.s8 %v967
        %v969 = vlaneseq
        %v970 = vshrl.u32 %v969, 7
        %v971 = vsub.s32 %v968, %v970
        %v972 = vrot.slane %v965, %v971
        %v973 = vcombine.low %v879, %v886
        %v975 = vunpack.c.l.s4 1983009808
        %v976 = vunpack.c.0.s8 %v975
        %v977 = vlaneseq
        %v978 = vshrl.u32 %v977, 7
        %v979 = vsub.s32 %v976, %v978
        %v980 = vrot.slane %v973, %v979
        %v981 = vcombine.low %v889, %v890
        %v983 = vunpack.c.l.s4 1983009808
        %v984 = vunpack.c.0.s8 %v983
        %v985 = vlaneseq
        %v986 = vshrl.u32 %v985, 7
        %v987 = vsub.s32 %v984, %v986
        %v988 = vrot.slane %v981, %v987
        %v989 = vcombine.low %v964, %v972
        %v991 = vunpack.c.l.s4 1934713408
        %v992 = vunpack.c.0.s8 %v991
        %v993 = vlaneseq
        %v994 = vshrl.u32 %v993, 7
        %v995 = vsub.s32 %v992, %v994
        %v996 = vrot.slane %v989, %v995
        %v997 = vcombine.low %v980, %v988
        %v999 = vunpack.c.l.s4 1934713408
        %v1000 = vunpack.c.0.s8 %v999
        %v1001 = vlaneseq
        %v1002 = vshrl.u32 %v1001, 7
        %v1003 = vsub.s32 %v1000, %v1002
        %v1004 = vrot.slane %v997, %v1003
        %v1005 = vcombine.low %v996, %v1004
        %v1006 = vcombine.high %v996, %v1004
        %v1007 = vcombine.low %v929, %v936
        %v1009 = vunpack.c.l.s4 1983009808
        %v1010 = vunpack.c.0.s8 %v1009
        %v1011 = vlaneseq
        %v1012 = vshrl.u32 %v1011, 7
        %v1013 = vsub.s32 %v1010, %v1012
        %v1014 = vrot.slane %v1007, %v1013
        %v1015 = vcombine.low %v953, %v954
        %v1017 = vunpack.c.l.s4 1983009808
        %v1018 = vunpack.c.0.s8 %v1017
        %v1019 = vlaneseq
        %v1020 = vshrl.u32 %v1019, 7
        %v1021 = vsub.s32 %v1018, %v1020
        %v1022 = vrot.slane %v1015, %v1021
        %v1023 = vcombine.low %v945, %v952
        %v1025 = vunpack.c.l.s4 1983009808
        %v1026 = vunpack.c.0.s8 %v1025
        %v1027 = vlaneseq
        %v1028 = vshrl.u32 %v1027, 7
        %v1029 = vsub.s32 %v1026, %v1028
        %v1030 = vrot.slane %v1023, %v1029
        %v1031 = vcombine.low %v955, %v956
        %v1033 = vunpack.c.l.s4 1983009808
        %v1034 = vunpack.c.0.s8 %v1033
        %v1035 = vlaneseq
        %v1036 = vshrl.u32 %v1035, 7
        %v1037 = vsub.s32 %v1034, %v1036
        %v1038 = vrot.slane %v1031, %v1037
        %v1039 = vcombine.low %v1014, %v1022
        %v1041 = vunpack.c.l.s4 1934713408
        %v1042 = vunpack.c.0.s8 %v1041
        %v1043 = vlaneseq
        %v1044 = vshrl.u32 %v1043, 7
        %v1045 = vsub.s32 %v1042, %v1044
        %v1046 = vrot.slane %v1039, %v1045
        %v1047 = vcombine.low %v1030, %v1038
        %v1049 = vunpack.c.l.s4 1934713408
        %v1050 = vunpack.c.0.s8 %v1049
        %v1051 = vlaneseq
        %v1052 = vshrl.u32 %v1051, 7
        %v1053 = vsub.s32 %v1050, %v1052
        %v1054 = vrot.slane %v1047, %v1053
        %v1055 = vcombine.low %v1046, %v1054
        %v1056 = vcombine.high %v1046, %v1054
        %1059 = vrot.lane.b32.xlu0 %v1006, 8
        %v1060 = vpop.permute.xlu0 %1059
        %1061 = vrot.lane.b32.xlu0 %v1056, 8
        %v1062 = vpop.permute.xlu0 %1061
        %vm1065 = vcmask 64512
        %v1066 = vsel %vm1065, %v1005, %v1060
        %v1067 = vsel %vm1065, %v1055, %v1062
        %v1068 = vld [vmem:[#allocation2] sm:$0xff]
        %v1070 = vsel %vm224, %v1068, 0
        %1072 = vmatprep.subr.mxu0 0.0
        %v1073 = vand.u32 %v1066, 4294901760
        %1074 = vmatpush1.msra.mxu0 %v1073
        %1075 = vmatprep.subr.mxu0 0.0
        %v1076 = vand.u32 %v1067, 4294901760
        %1077 = vmatpush1.msra.mxu0 %v1076
        %1078 = vmatprep.subr.mxu0 0.0
        %1079 = vmatpush1.msra.mxu0 0.0
        %1080 = vmatprep.subr.mxu0 0.0
        %1081 = vmatpush1.msra.mxu0 0.0
        %1082 = vmatprep.subr.mxu0 0.0
        %1083 = vmatpush1.msra.mxu0 0.0
        %1084 = vmatprep.subr.mxu0 0.0
        %1085 = vmatpush1.msra.mxu0 0.0
        %1086 = vmatprep.subr.mxu0 0.0
        %1087 = vmatpush1.msra.mxu0 0.0
        %1088 = vmatprep.subr.mxu0 0.0
        %1089 = vmatpush1.msra.mxu0 0.0
        %1090 = vmatprep.subr.mxu0 0.0
        %1091 = vmatpush1.msra.mxu0 0.0
        %1092 = vmatprep.subr.mxu0 0.0
        %1093 = vmatpush1.msra.mxu0 0.0
        %1094 = vmatprep.subr.mxu0 0.0
        %1095 = vmatpush1.msra.mxu0 0.0
        %1096 = vmatprep.subr.mxu0 0.0
        %1097 = vmatpush1.msra.mxu0 0.0
        %1098 = vmatprep.subr.mxu0 0.0
        %1099 = vmatpush1.msra.mxu0 0.0
        %1100 = vmatprep.subr.mxu0 0.0
        %1101 = vmatpush1.msra.mxu0 0.0
        %1102 = vmatprep.subr.mxu0 0.0
        %1103 = vmatpush1.msra.mxu0 0.0
        %1104 = vmatprep.subr.mxu0 0.0
        %1105 = vmatpush1.msra.mxu0 0.0
        %1106 = vmatprep.subr.mxu0 0.0
        %1107 = vmatpush1.msra.mxu0 0.0
        %1108 = vmatprep.subr.mxu0 0.0
        %1109 = vmatpush1.msra.mxu0 0.0
        %1110 = vmatprep.subr.mxu0 0.0
        %1111 = vmatpush1.msra.mxu0 0.0
        %1112 = vmatprep.subr.mxu0 0.0
        %1113 = vmatpush1.msra.mxu0 0.0
        %1114 = vmatprep.subr.mxu0 0.0
        %1115 = vmatpush1.msra.mxu0 0.0
        %1116 = vmatprep.subr.mxu0 0.0
        %1117 = vmatpush1.msra.mxu0 0.0
        %1118 = vmatprep.subr.mxu0 0.0
        %1119 = vmatpush1.msra.mxu0 0.0
        %1120 = vmatprep.subr.mxu0 0.0
        %1121 = vmatpush1.msra.mxu0 0.0
        %1122 = vmatprep.subr.mxu0 0.0
        %1123 = vmatpush1.msra.mxu0 0.0
        %1124 = vmatprep.subr.mxu0 0.0
        %1125 = vmatpush1.msra.mxu0 0.0
        %1126 = vmatprep.subr.mxu0 0.0
        %1127 = vmatpush1.msra.mxu0 0.0
        %1128 = vmatprep.subr.mxu0 0.0
        %1129 = vmatpush1.msra.mxu0 0.0
        %1130 = vmatprep.subr.mxu0 0.0
        %1131 = vmatpush1.msra.mxu0 0.0
        %1132 = vmatprep.subr.mxu0 0.0
        %1133 = vmatpush1.msra.mxu0 0.0
        %1134 = vmatprep.subr.mxu0 0.0
        %1135 = vmatpush1.msra.mxu0 0.0
        %1136 = vmatprep.subr.mxu0 0.0
        %1137 = vmatpush1.msra.mxu0 0.0
        %1138 = vmatprep.mubr.f32.mxu0 0.0
        %v1139 = vand.u32 %v1070, 4294901760
        %v1140 = vsub.f32 %v1070, %v1139
        %v1141 = vand.u32 %v1140, 4294901760
        %v1142 = vsub.f32 %v1140, %v1141
        %v1143 = vand.u32 %v1142, 4294901760
        %1144 = vmatmul.mubr.f32.gmra.mrb[0].mxu0 %v1143
        %v1145 = vpop.f32.mrb[0].mxu0
        %v1146 = vadd.f32 0.0, %v1145
        %v1147 = vpop.f32.mrb[0].mxu0
        %1148 = vdwg.mxu0
        %1149 = vmatprep.subr.mxu0 0.0
        %v1150 = vand.u32 %v1066, 4294901760
        %v1151 = vsub.f32 %v1066, %v1150
        %v1152 = vand.u32 %v1151, 4294901760
        %v1153 = vsub.f32 %v1151, %v1152
        %v1154 = vand.u32 %v1153, 4294901760
        %1155 = vmatpush1.msra.mxu0 %v1154
        %1156 = vmatprep.subr.mxu0 0.0
        %v1157 = vand.u32 %v1067, 4294901760
        %v1158 = vsub.f32 %v1067, %v1157
        %v1159 = vand.u32 %v1158, 4294901760
        %v1160 = vsub.f32 %v1158, %v1159
        %v1161 = vand.u32 %v1160, 4294901760
        %1162 = vmatpush1.msra.mxu0 %v1161
        %1163 = vmatprep.subr.mxu0 0.0
        %1164 = vmatpush1.msra.mxu0 0.0
        %1165 = vmatprep.subr.mxu0 0.0
        %1166 = vmatpush1.msra.mxu0 0.0
        %1167 = vmatprep.subr.mxu0 0.0
        %1168 = vmatpush1.msra.mxu0 0.0
        %1169 = vmatprep.subr.mxu0 0.0
        %1170 = vmatpush1.msra.mxu0 0.0
        %1171 = vmatprep.subr.mxu0 0.0
        %1172 = vmatpush1.msra.mxu0 0.0
        %1173 = vmatprep.subr.mxu0 0.0
        %1174 = vmatpush1.msra.mxu0 0.0
        %1175 = vmatprep.subr.mxu0 0.0
        %1176 = vmatpush1.msra.mxu0 0.0
        %1177 = vmatprep.subr.mxu0 0.0
        %1178 = vmatpush1.msra.mxu0 0.0
        %1179 = vmatprep.subr.mxu0 0.0
        %1180 = vmatpush1.msra.mxu0 0.0
        %1181 = vmatprep.subr.mxu0 0.0
        %1182 = vmatpush1.msra.mxu0 0.0
        %1183 = vmatprep.subr.mxu0 0.0
        %1184 = vmatpush1.msra.mxu0 0.0
        %1185 = vmatprep.subr.mxu0 0.0
        %1186 = vmatpush1.msra.mxu0 0.0
        %1187 = vmatprep.subr.mxu0 0.0
        %1188 = vmatpush1.msra.mxu0 0.0
        %1189 = vmatprep.subr.mxu0 0.0
        %1190 = vmatpush1.msra.mxu0 0.0
        %1191 = vmatprep.subr.mxu0 0.0
        %1192 = vmatpush1.msra.mxu0 0.0
        %1193 = vmatprep.subr.mxu0 0.0
        %1194 = vmatpush1.msra.mxu0 0.0
        %1195 = vmatprep.subr.mxu0 0.0
        %1196 = vmatpush1.msra.mxu0 0.0
        %1197 = vmatprep.subr.mxu0 0.0
        %1198 = vmatpush1.msra.mxu0 0.0
        %1199 = vmatprep.subr.mxu0 0.0
        %1200 = vmatpush1.msra.mxu0 0.0
        %1201 = vmatprep.subr.mxu0 0.0
        %1202 = vmatpush1.msra.mxu0 0.0
        %1203 = vmatprep.subr.mxu0 0.0
        %1204 = vmatpush1.msra.mxu0 0.0
        %1205 = vmatprep.subr.mxu0 0.0
        %1206 = vmatpush1.msra.mxu0 0.0
        %1207 = vmatprep.subr.mxu0 0.0
        %1208 = vmatpush1.msra.mxu0 0.0
        %1209 = vmatprep.subr.mxu0 0.0
        %1210 = vmatpush1.msra.mxu0 0.0
        %1211 = vmatprep.subr.mxu0 0.0
        %1212 = vmatpush1.msra.mxu0 0.0
        %1213 = vmatprep.subr.mxu0 0.0
        %1214 = vmatpush1.msra.mxu0 0.0
        %1215 = vmatprep.subr.mxu0 0.0
        %1216 = vmatpush1.msra.mxu0 0.0
        %1217 = vmatprep.subr.mxu0 0.0
        %1218 = vmatpush1.msra.mxu0 0.0
        %1219 = vmatprep.subr.mxu0 0.0
        %1220 = vmatpush1.msra.mxu0 0.0
        %1221 = vmatprep.subr.mxu0 0.0
        %1222 = vmatpush1.msra.mxu0 0.0
        %1223 = vmatprep.mubr.f32.mxu0 0.0
        %v1224 = vand.u32 %v1070, 4294901760
        %1225 = vmatmul.mubr.f32.gmra.mrb[0].mxu0 %v1224
        %v1226 = vpop.f32.mrb[0].mxu0
        %v1227 = vadd.f32 %v1146, %v1226
        %v1228 = vpop.f32.mrb[0].mxu0
        %1229 = vdwg.mxu0
        %1230 = vmatprep.subr.mxu0 0.0
        %v1231 = vand.u32 %v1066, 4294901760
        %v1232 = vsub.f32 %v1066, %v1231
        %1233 = vmatpush1.msra.mxu0 %v1232
        %1234 = vmatprep.subr.mxu0 0.0
        %v1235 = vand.u32 %v1067, 4294901760
        %v1236 = vsub.f32 %v1067, %v1235
        %1237 = vmatpush1.msra.mxu0 %v1236
        %1238 = vmatprep.subr.mxu0 0.0
        %1239 = vmatpush1.msra.mxu0 0.0
        %1240 = vmatprep.subr.mxu0 0.0
        %1241 = vmatpush1.msra.mxu0 0.0
        %1242 = vmatprep.subr.mxu0 0.0
        %1243 = vmatpush1.msra.mxu0 0.0
        %1244 = vmatprep.subr.mxu0 0.0
        %1245 = vmatpush1.msra.mxu0 0.0
        %1246 = vmatprep.subr.mxu0 0.0
        %1247 = vmatpush1.msra.mxu0 0.0
        %1248 = vmatprep.subr.mxu0 0.0
        %1249 = vmatpush1.msra.mxu0 0.0
        %1250 = vmatprep.subr.mxu0 0.0
        %1251 = vmatpush1.msra.mxu0 0.0
        %1252 = vmatprep.subr.mxu0 0.0
        %1253 = vmatpush1.msra.mxu0 0.0
        %1254 = vmatprep.subr.mxu0 0.0
        %1255 = vmatpush1.msra.mxu0 0.0
        %1256 = vmatprep.subr.mxu0 0.0
        %1257 = vmatpush1.msra.mxu0 0.0
        %1258 = vmatprep.subr.mxu0 0.0
        %1259 = vmatpush1.msra.mxu0 0.0
        %1260 = vmatprep.subr.mxu0 0.0
        %1261 = vmatpush1.msra.mxu0 0.0
        %1262 = vmatprep.subr.mxu0 0.0
        %1263 = vmatpush1.msra.mxu0 0.0
        %1264 = vmatprep.subr.mxu0 0.0
        %1265 = vmatpush1.msra.mxu0 0.0
        %1266 = vmatprep.subr.mxu0 0.0
        %1267 = vmatpush1.msra.mxu0 0.0
        %1268 = vmatprep.subr.mxu0 0.0
        %1269 = vmatpush1.msra.mxu0 0.0
        %1270 = vmatprep.subr.mxu0 0.0
        %1271 = vmatpush1.msra.mxu0 0.0
        %1272 = vmatprep.subr.mxu0 0.0
        %1273 = vmatpush1.msra.mxu0 0.0
        %1274 = vmatprep.subr.mxu0 0.0
        %1275 = vmatpush1.msra.mxu0 0.0
        %1276 = vmatprep.subr.mxu0 0.0
        %1277 = vmatpush1.msra.mxu0 0.0
        %1278 = vmatprep.subr.mxu0 0.0
        %1279 = vmatpush1.msra.mxu0 0.0
        %1280 = vmatprep.subr.mxu0 0.0
        %1281 = vmatpush1.msra.mxu0 0.0
        %1282 = vmatprep.subr.mxu0 0.0
        %1283 = vmatpush1.msra.mxu0 0.0
        %1284 = vmatprep.subr.mxu0 0.0
        %1285 = vmatpush1.msra.mxu0 0.0
        %1286 = vmatprep.subr.mxu0 0.0
        %1287 = vmatpush1.msra.mxu0 0.0
        %1288 = vmatprep.subr.mxu0 0.0
        %1289 = vmatpush1.msra.mxu0 0.0
        %1290 = vmatprep.subr.mxu0 0.0
        %1291 = vmatpush1.msra.mxu0 0.0
        %1292 = vmatprep.subr.mxu0 0.0
        %1293 = vmatpush1.msra.mxu0 0.0
        %1294 = vmatprep.subr.mxu0 0.0
        %1295 = vmatpush1.msra.mxu0 0.0
        %1296 = vmatprep.subr.mxu0 0.0
        %1297 = vmatpush1.msra.mxu0 0.0
        %1298 = vmatprep.mubr.f32.mxu0 0.0
        %v1299 = vand.u32 %v1070, 4294901760
        %v1300 = vsub.f32 %v1070, %v1299
        %1301 = vmatmul.mubr.f32.gmra.mrb[0].mxu0 %v1300
        %v1302 = vpop.f32.mrb[0].mxu0
        %v1303 = vadd.f32 %v1227, %v1302
        %v1304 = vpop.f32.mrb[0].mxu0
        %1305 = vdwg.mxu0
        %1306 = vmatprep.subr.mxu0 0.0
        %v1307 = vand.u32 %v1066, 4294901760
        %1308 = vmatpush1.msra.mxu0 %v1307
        %1309 = vmatprep.subr.mxu0 0.0
        %v1310 = vand.u32 %v1067, 4294901760
        %1311 = vmatpush1.msra.mxu0 %v1310
        %1312 = vmatprep.subr.mxu0 0.0
        %1313 = vmatpush1.msra.mxu0 0.0
        %1314 = vmatprep.subr.mxu0 0.0
        %1315 = vmatpush1.msra.mxu0 0.0
        %1316 = vmatprep.subr.mxu0 0.0
        %1317 = vmatpush1.msra.mxu0 0.0
        %1318 = vmatprep.subr.mxu0 0.0
        %1319 = vmatpush1.msra.mxu0 0.0
        %1320 = vmatprep.subr.mxu0 0.0
        %1321 = vmatpush1.msra.mxu0 0.0
        %1322 = vmatprep.subr.mxu0 0.0
        %1323 = vmatpush1.msra.mxu0 0.0
        %1324 = vmatprep.subr.mxu0 0.0
        %1325 = vmatpush1.msra.mxu0 0.0
        %1326 = vmatprep.subr.mxu0 0.0
        %1327 = vmatpush1.msra.mxu0 0.0
        %1328 = vmatprep.subr.mxu0 0.0
        %1329 = vmatpush1.msra.mxu0 0.0
        %1330 = vmatprep.subr.mxu0 0.0
        %1331 = vmatpush1.msra.mxu0 0.0
        %1332 = vmatprep.subr.mxu0 0.0
        %1333 = vmatpush1.msra.mxu0 0.0
        %1334 = vmatprep.subr.mxu0 0.0
        %1335 = vmatpush1.msra.mxu0 0.0
        %1336 = vmatprep.subr.mxu0 0.0
        %1337 = vmatpush1.msra.mxu0 0.0
        %1338 = vmatprep.subr.mxu0 0.0
        %1339 = vmatpush1.msra.mxu0 0.0
        %1340 = vmatprep.subr.mxu0 0.0
        %1341 = vmatpush1.msra.mxu0 0.0
        %1342 = vmatprep.subr.mxu0 0.0
        %1343 = vmatpush1.msra.mxu0 0.0
        %1344 = vmatprep.subr.mxu0 0.0
        %1345 = vmatpush1.msra.mxu0 0.0
        %1346 = vmatprep.subr.mxu0 0.0
        %1347 = vmatpush1.msra.mxu0 0.0
        %1348 = vmatprep.subr.mxu0 0.0
        %1349 = vmatpush1.msra.mxu0 0.0
        %1350 = vmatprep.subr.mxu0 0.0
        %1351 = vmatpush1.msra.mxu0 0.0
        %1352 = vmatprep.subr.mxu0 0.0
        %1353 = vmatpush1.msra.mxu0 0.0
        %1354 = vmatprep.subr.mxu0 0.0
        %1355 = vmatpush1.msra.mxu0 0.0
        %1356 = vmatprep.subr.mxu0 0.0
        %1357 = vmatpush1.msra.mxu0 0.0
        %1358 = vmatprep.subr.mxu0 0.0
        %1359 = vmatpush1.msra.mxu0 0.0
        %1360 = vmatprep.subr.mxu0 0.0
        %1361 = vmatpush1.msra.mxu0 0.0
        %1362 = vmatprep.subr.mxu0 0.0
        %1363 = vmatpush1.msra.mxu0 0.0
        %1364 = vmatprep.subr.mxu0 0.0
        %1365 = vmatpush1.msra.mxu0 0.0
        %1366 = vmatprep.subr.mxu0 0.0
        %1367 = vmatpush1.msra.mxu0 0.0
        %1368 = vmatprep.subr.mxu0 0.0
        %1369 = vmatpush1.msra.mxu0 0.0
        %1370 = vmatprep.subr.mxu0 0.0
        %1371 = vmatpush1.msra.mxu0 0.0
        %1372 = vmatprep.mubr.f32.mxu0 0.0
        %v1373 = vand.u32 %v1070, 4294901760
        %v1374 = vsub.f32 %v1070, %v1373
        %v1375 = vand.u32 %v1374, 4294901760
        %1376 = vmatmul.mubr.f32.gmra.mrb[0].mxu0 %v1375
        %v1377 = vpop.f32.mrb[0].mxu0
        %v1378 = vadd.f32 %v1303, %v1377
        %v1379 = vpop.f32.mrb[0].mxu0
        %1380 = vdwg.mxu0
        %1381 = vmatprep.subr.mxu0 0.0
        %v1382 = vand.u32 %v1066, 4294901760
        %v1383 = vsub.f32 %v1066, %v1382
        %v1384 = vand.u32 %v1383, 4294901760
        %1385 = vmatpush1.msra.mxu0 %v1384
        %1386 = vmatprep.subr.mxu0 0.0
        %v1387 = vand.u32 %v1067, 4294901760
        %v1388 = vsub.f32 %v1067, %v1387
        %v1389 = vand.u32 %v1388, 4294901760
        %1390 = vmatpush1.msra.mxu0 %v1389
        %1391 = vmatprep.subr.mxu0 0.0
        %1392 = vmatpush1.msra.mxu0 0.0
        %1393 = vmatprep.subr.mxu0 0.0
        %1394 = vmatpush1.msra.mxu0 0.0
        %1395 = vmatprep.subr.mxu0 0.0
        %1396 = vmatpush1.msra.mxu0 0.0
        %1397 = vmatprep.subr.mxu0 0.0
        %1398 = vmatpush1.msra.mxu0 0.0
        %1399 = vmatprep.subr.mxu0 0.0
        %1400 = vmatpush1.msra.mxu0 0.0
        %1401 = vmatprep.subr.mxu0 0.0
        %1402 = vmatpush1.msra.mxu0 0.0
        %1403 = vmatprep.subr.mxu0 0.0
        %1404 = vmatpush1.msra.mxu0 0.0
        %1405 = vmatprep.subr.mxu0 0.0
        %1406 = vmatpush1.msra.mxu0 0.0
        %1407 = vmatprep.subr.mxu0 0.0
        %1408 = vmatpush1.msra.mxu0 0.0
        %1409 = vmatprep.subr.mxu0 0.0
        %1410 = vmatpush1.msra.mxu0 0.0
        %1411 = vmatprep.subr.mxu0 0.0
        %1412 = vmatpush1.msra.mxu0 0.0
        %1413 = vmatprep.subr.mxu0 0.0
        %1414 = vmatpush1.msra.mxu0 0.0
        %1415 = vmatprep.subr.mxu0 0.0
        %1416 = vmatpush1.msra.mxu0 0.0
        %1417 = vmatprep.subr.mxu0 0.0
        %1418 = vmatpush1.msra.mxu0 0.0
        %1419 = vmatprep.subr.mxu0 0.0
        %1420 = vmatpush1.msra.mxu0 0.0
        %1421 = vmatprep.subr.mxu0 0.0
        %1422 = vmatpush1.msra.mxu0 0.0
        %1423 = vmatprep.subr.mxu0 0.0
        %1424 = vmatpush1.msra.mxu0 0.0
        %1425 = vmatprep.subr.mxu0 0.0
        %1426 = vmatpush1.msra.mxu0 0.0
        %1427 = vmatprep.subr.mxu0 0.0
        %1428 = vmatpush1.msra.mxu0 0.0
        %1429 = vmatprep.subr.mxu0 0.0
        %1430 = vmatpush1.msra.mxu0 0.0
        %1431 = vmatprep.subr.mxu0 0.0
        %1432 = vmatpush1.msra.mxu0 0.0
        %1433 = vmatprep.subr.mxu0 0.0
        %1434 = vmatpush1.msra.mxu0 0.0
        %1435 = vmatprep.subr.mxu0 0.0
        %1436 = vmatpush1.msra.mxu0 0.0
        %1437 = vmatprep.subr.mxu0 0.0
        %1438 = vmatpush1.msra.mxu0 0.0
        %1439 = vmatprep.subr.mxu0 0.0
        %1440 = vmatpush1.msra.mxu0 0.0
        %1441 = vmatprep.subr.mxu0 0.0
        %1442 = vmatpush1.msra.mxu0 0.0
        %1443 = vmatprep.subr.mxu0 0.0
        %1444 = vmatpush1.msra.mxu0 0.0
        %1445 = vmatprep.subr.mxu0 0.0
        %1446 = vmatpush1.msra.mxu0 0.0
        %1447 = vmatprep.subr.mxu0 0.0
        %1448 = vmatpush1.msra.mxu0 0.0
        %1449 = vmatprep.subr.mxu0 0.0
        %1450 = vmatpush1.msra.mxu0 0.0
        %1451 = vmatprep.mubr.f32.mxu0 0.0
        %v1452 = vand.u32 %v1070, 4294901760
        %1453 = vmatmul.mubr.f32.gmra.mrb[0].mxu0 %v1452
        %v1454 = vpop.f32.mrb[0].mxu0
        %v1455 = vadd.f32 %v1378, %v1454
        %v1456 = vpop.f32.mrb[0].mxu0
        %1457 = vdwg.mxu0
        %1458 = vmatprep.subr.mxu0 0.0
        %v1459 = vand.u32 %v1066, 4294901760
        %1460 = vmatpush1.msra.mxu0 %v1459
        %1461 = vmatprep.subr.mxu0 0.0
        %v1462 = vand.u32 %v1067, 4294901760
        %1463 = vmatpush1.msra.mxu0 %v1462
        %1464 = vmatprep.subr.mxu0 0.0
        %1465 = vmatpush1.msra.mxu0 0.0
        %1466 = vmatprep.subr.mxu0 0.0
        %1467 = vmatpush1.msra.mxu0 0.0
        %1468 = vmatprep.subr.mxu0 0.0
        %1469 = vmatpush1.msra.mxu0 0.0
        %1470 = vmatprep.subr.mxu0 0.0
        %1471 = vmatpush1.msra.mxu0 0.0
        %1472 = vmatprep.subr.mxu0 0.0
        %1473 = vmatpush1.msra.mxu0 0.0
        %1474 = vmatprep.subr.mxu0 0.0
        %1475 = vmatpush1.msra.mxu0 0.0
        %1476 = vmatprep.subr.mxu0 0.0
        %1477 = vmatpush1.msra.mxu0 0.0
        %1478 = vmatprep.subr.mxu0 0.0
        %1479 = vmatpush1.msra.mxu0 0.0
        %1480 = vmatprep.subr.mxu0 0.0
        %1481 = vmatpush1.msra.mxu0 0.0
        %1482 = vmatprep.subr.mxu0 0.0
        %1483 = vmatpush1.msra.mxu0 0.0
        %1484 = vmatprep.subr.mxu0 0.0
        %1485 = vmatpush1.msra.mxu0 0.0
        %1486 = vmatprep.subr.mxu0 0.0
        %1487 = vmatpush1.msra.mxu0 0.0
        %1488 = vmatprep.subr.mxu0 0.0
        %1489 = vmatpush1.msra.mxu0 0.0
        %1490 = vmatprep.subr.mxu0 0.0
        %1491 = vmatpush1.msra.mxu0 0.0
        %1492 = vmatprep.subr.mxu0 0.0
        %1493 = vmatpush1.msra.mxu0 0.0
        %1494 = vmatprep.subr.mxu0 0.0
        %1495 = vmatpush1.msra.mxu0 0.0
        %1496 = vmatprep.subr.mxu0 0.0
        %1497 = vmatpush1.msra.mxu0 0.0
        %1498 = vmatprep.subr.mxu0 0.0
        %1499 = vmatpush1.msra.mxu0 0.0
        %1500 = vmatprep.subr.mxu0 0.0
        %1501 = vmatpush1.msra.mxu0 0.0
        %1502 = vmatprep.subr.mxu0 0.0
        %1503 = vmatpush1.msra.mxu0 0.0
        %1504 = vmatprep.subr.mxu0 0.0
        %1505 = vmatpush1.msra.mxu0 0.0
        %1506 = vmatprep.subr.mxu0 0.0
        %1507 = vmatpush1.msra.mxu0 0.0
        %1508 = vmatprep.subr.mxu0 0.0
        %1509 = vmatpush1.msra.mxu0 0.0
        %1510 = vmatprep.subr.mxu0 0.0
        %1511 = vmatpush1.msra.mxu0 0.0
        %1512 = vmatprep.subr.mxu0 0.0
        %1513 = vmatpush1.msra.mxu0 0.0
        %1514 = vmatprep.subr.mxu0 0.0
        %1515 = vmatpush1.msra.mxu0 0.0
        %1516 = vmatprep.subr.mxu0 0.0
        %1517 = vmatpush1.msra.mxu0 0.0
        %1518 = vmatprep.subr.mxu0 0.0
        %1519 = vmatpush1.msra.mxu0 0.0
        %1520 = vmatprep.subr.mxu0 0.0
        %1521 = vmatpush1.msra.mxu0 0.0
        %1522 = vmatprep.subr.mxu0 0.0
        %1523 = vmatpush1.msra.mxu0 0.0
        %1524 = vmatprep.mubr.f32.mxu0 0.0
        %v1525 = vand.u32 %v1070, 4294901760
        %1526 = vmatmul.mubr.f32.gmra.mrb[0].mxu0 %v1525
        %v1527 = vpop.f32.mrb[0].mxu0
        %v1528 = vadd.f32 %v1455, %v1527
        %v1529 = vpop.f32.mrb[0].mxu0
        %1530 = vdwg.mxu0
        %1531 = vst.msk [vmem:[%s216] sm:$0xff] %vm224, %v1528
        %s1532 = sand.u32 %s97, 1
        %s1533 = scalar_lea.sflag [#allocation4], %s1532
        %s1534 = sand.u32 %s97, 1
        %s1535 = smul.addr %s1534, 8
        %s1536 = scalar_lea.vmem [#allocation8], %s1535
        // Predicated region
        $region45: #{tpu_custom_call.1} parent=31 // pred_check
          %p1537 = pneg %p107
        $region46: #{tpu_custom_call.1} parent=31 // pred_check_branch
          %1539 = sbr.rel (%p1537) target = $region48
        $region47: #{tpu_custom_call.1} parent=31 // pred_region
          %s1541 = ssub.s32 128, 128
          %1542 = vsyncadd %s1533, %s1541
          %s1543 = smul.addr %s21, 128
          %s1544 = scalar_lea.hbm %s3, %s1543
          %s1546 = sshll.u32 %s1536, 4
          %s1547 = int_to_ptr.vmem [resolvable:$true] %s1546
          %1549 = dma.vmem_to_hbm [thread:$0]  %s1547, 128, %s1544, %s1533
        $region48: #{tpu_custom_call.1} parent=31 // pred_fallthru
          _
      $region32: #{tpu_custom_call.1} parent=5 // pred_fallthru
        _
      %p1550 = scmp.le.s32.totalorder 2, %s16
      // Predicated region
      $region49: #{tpu_custom_call.1} parent=5 // pred_check
        %p1551 = pneg %p1550
      $region50: #{tpu_custom_call.1} parent=5 // pred_check_branch
        %1553 = sbr.rel (%p1551) target = $region52
      $region51: #{tpu_custom_call.1} parent=5 // pred_region
        %s1554 = ssub.s32 %s16, 2
        // Predicated region
        $region53: #{tpu_custom_call.1} parent=51 // pred_check
          %p1555 = pneg %p113
        $region54: #{tpu_custom_call.1} parent=51 // pred_check_branch
          %1557 = sbr.rel (%p1555) target = $region56
        $region55: #{tpu_custom_call.1} parent=51 // pred_region
          %s1558 = sand.u32 %s98, 1
          %s1559 = scalar_lea.sflag [#allocation4], %s1558
          %s1560 = sand.u32 %s98, 1
          %s1561 = smul.addr %s1560, 8
          %s1562 = scalar_lea.vmem [#allocation8], %s1561
          %1563 = dma.done %s1559, 128
        $region56: #{tpu_custom_call.1} parent=51 // pred_fallthru
          _
      $region52: #{tpu_custom_call.1} parent=5 // pred_fallthru
        _
    $region6: #{tpu_custom_call.1} parent=1 // loop_footer
      %s20 = sadd.s32 1, %s16
    $region7: #{tpu_custom_call.1} parent=1 // loop_footer_branch
      %15 = sbr.rel target = $region3
    $region8: #{tpu_custom_call.1} parent=1 // loop_exit
      _
    %1564 = vsyncpa [#allocation3], 1
    %s1565 = scalar_lea.sflag [#allocation3], 1
    %1566 = vsyncpa %s1565, 1
    %1567 = vsyncpa [#allocation6], 1
    %s1568 = scalar_lea.sflag [#allocation6], 1
    %1569 = vsyncpa %s1568, 1
    %1570 = vsyncpa [#allocation4], 1
    %s1571 = scalar_lea.sflag [#allocation4], 1
    %1572 = vsyncpa %s1571, 1

</llo_original>
